<compile_context>
chip_gen: v7x
topology: tpu7x:2x2x1
jax: 0.10.0
libtpu: 0.0.40
codegen_flags: <defaults>
</compile_context>

<pallas_src>
import jax
import jax.numpy as jnp
from jax.experimental import pallas as pl
from jax.experimental.pallas import tpu as pltpu  # noqa: F401  (TPU backend)


# ----------------------------------------------------------------------------
# Kernel: whole forward pass in one invocation (no grid)
# ----------------------------------------------------------------------------
def lstm_kernel(xtb_ref,      # (T*B, D)   x, time-major flattened (row = t*B+b)
                wih0_ref,     # (D, 4H)    W_ih_l0^T
                b0_ref,       # (1, 4H)    b_ih_l0 + b_hh_l0
                wcat_ref,     # (H, 8H)    [W_hh_l0^T | W_ih_l1^T]
                whh1_ref,     # (H, 4H)    W_hh_l1^T
                b1_ref,       # (1, 4H)    b_ih_l1 + b_hh_l1
                wfc_ref,      # (H, D)     fc weight^T
                bfc_ref,      # (1, D)     fc bias
                out_ref):     # (B, D)
    B, D = out_ref.shape
    T = xtb_ref.shape[0] // B
    H = whh1_ref.shape[0]
    G = 4 * H

    def cell(gates, c_prev):
        # One full-width sigmoid over the whole gates block (i|f|g|o), one
        # tanh on the g slice only; i/f/o sliced from the activated result.
        sg = jax.nn.sigmoid(gates)
        g = jnp.tanh(gates[:, 2 * H:3 * H])
        i = sg[:, 0 * H:1 * H]
        f = sg[:, 1 * H:2 * H]
        o = sg[:, 3 * H:4 * H]
        c_new = f * c_prev + i * g
        h_new = o * jnp.tanh(c_new)
        return h_new, c_new

    # ---- Hoisted layer-0 input projection: one MXU call for all T steps ---
    # xg0[t*B + b, :] = x[b, t, :] @ W_ih_l0^T + (b_ih_l0 + b_hh_l0)
    xg0 = (jnp.dot(xtb_ref[...], wih0_ref[...],
                   preferred_element_type=jnp.float32)
           + b0_ref[...])                                   # (T*B, 4H)

    # Layer-1 bias, broadcast once (hoisted out of the unrolled loop).
    b1b = jnp.broadcast_to(b1_ref[...], (B, G))

    zeros = jnp.zeros((B, H), jnp.float32)

    # ---- s = 0 prologue: layer-0 cell at t=0 (h0_prev = 0 => rec0 = 0) ----
    h0, c0 = cell(xg0[0:B, :], zeros)
    h1, c1 = zeros, zeros

    # ---- steady state, virtual steps s = 1..T-1 (layers skewed by 1) ------
    # invariant at loop entry: h0/c0 = layer-0 state at t=s-1,
    #                          h1/c1 = layer-1 state at t=s-2.
    for s in range(1, T):
        # One K=H, N=8H matmul feeds layer0's recurrence (t=s) AND layer1's
        # input projection (t=s-1): both consume h0[s-1].
        hh = jnp.dot(h0, wcat_ref[...], preferred_element_type=jnp.float32)
        rec1 = jnp.dot(h1, whh1_ref[...], preferred_element_type=jnp.float32)

        gates0 = xg0[s * B:(s + 1) * B, :] + hh[:, :G]      # layer 0, t = s
        gates1 = hh[:, G:] + rec1 + b1b                     # layer 1, t = s-1

        # Stack both cells -> single full-width sigmoid / tanh / VPU pass.
        h_new, c_new = cell(jnp.concatenate([gates0, gates1], axis=0),
                            jnp.concatenate([c0, c1], axis=0))
        h0, c0 = h_new[:B], c_new[:B]
        h1, c1 = h_new[B:], c_new[B:]

    # ---- s = T epilogue: layer-1 cell at t = T-1 ---------------------------
    in1 = jnp.dot(h0, wcat_ref[:, G:2 * G],
                  preferred_element_type=jnp.float32)       # W_ih_l1^T slice
    rec1 = jnp.dot(h1, whh1_ref[...], preferred_element_type=jnp.float32)
    h1, c1 = cell(in1 + rec1 + b1b, c1)

    # ---- final FC on layer-1 last hidden state (dropout = identity) -------
    out_ref[...] = (jnp.dot(h1, wfc_ref[...],
                            preferred_element_type=jnp.float32)
                    + bfc_ref[...])


# ----------------------------------------------------------------------------
# Wrapper
# ----------------------------------------------------------------------------
@jax.jit
def lstm_model_forward(x, params):
    """x: (B, T, D) float32 (batch_first, like PyTorch).  Returns (B, D)."""
    B, T, D = x.shape
    H = params["w_hh_l0"].shape[1]            # w_hh_l0: (4H, H)

    # Time-major flatten of x so the kernel's per-step input-gate slice is a
    # contiguous (B, 4H) sublane block (no in-kernel reshapes).
    x_tb = jnp.swapaxes(x, 0, 1).reshape(T * B, D)

    # Pre-transpose / fuse weights so the kernel does plain row-major matmuls.
    wih0 = params["w_ih_l0"].T                               # (D, 4H)
    b0 = (params["b_ih_l0"] + params["b_hh_l0"]).reshape(1, 4 * H)
    wcat = jnp.concatenate([params["w_hh_l0"].T,             # (H, 4H)  rec0
                            params["w_ih_l1"].T],            # (H, 4H)  in1
                           axis=1)                           # (H, 8H)
    whh1 = params["w_hh_l1"].T                               # (H, 4H)
    b1 = (params["b_ih_l1"] + params["b_hh_l1"]).reshape(1, 4 * H)
    wfc = params["fc_w"].T                                   # (H, D)
    bfc = params["fc_b"].reshape(1, D)                       # (1, D)

    # Single invocation, no grid: every operand is a full-array VMEM block
    # (< 100 KiB total, well under the 32 MiB default scoped limit on v7x),
    # so there is no per-step pipelining / double-buffering overhead at all.
    return pl.pallas_call(
        lstm_kernel,
        out_shape=jax.ShapeDtypeStruct((B, D), jnp.float32),
    )(x_tb, wih0, b0, wcat, whh1, b1, wfc, bfc)


# ----------------------------------------------------------------------------
# Deterministic parameter init (PyTorch-style uniform(-1/sqrt(H), 1/sqrt(H)))
# ----------------------------------------------------------------------------
def init_params(key, input_dim, hidden_dim):
    H, D = hidden_dim, input_dim
    stdv = 1.0 / jnp.sqrt(jnp.float32(H))
    names_shapes = [
        ("w_ih_l0", (4 * H, D)), ("w_hh_l0", (4 * H, H)),
        ("b_ih_l0", (4 * H,)),   ("b_hh_l0", (4 * H,)),
        ("w_ih_l1", (4 * H, H)), ("w_hh_l1", (4 * H, H)),
        ("b_ih_l1", (4 * H,)),   ("b_hh_l1", (4 * H,)),
        ("fc_w", (D, H)),        ("fc_b", (D,)),
    ]
    params = {}
    keys = jax.random.split(key, len(names_shapes))
    for k, (name, shape) in zip(keys, names_shapes):
        params[name] = jax.random.uniform(
            k, shape, jnp.float32, minval=-stdv, maxval=stdv)
    return params


# ----------------------------------------------------------------------------
# Pure-JAX reference (exactly mirrors PyTorch eval-mode forward, no skew)
# ----------------------------------------------------------------------------
def reference_forward(x, params):
    B, T, D = x.shape
    H = params["w_hh_l0"].shape[1]

    def cell(x_t, h, c, wih, whh, bih, bhh):
        g = x_t @ wih.T + bih + h @ whh.T + bhh
        i = jax.nn.sigmoid(g[:, 0 * H:1 * H])
        f = jax.nn.sigmoid(g[:, 1 * H:2 * H])
        gg = jnp.tanh(g[:, 2 * H:3 * H])
        o = jax.nn.sigmoid(g[:, 3 * H:4 * H])
        c = f * c + i * gg
        h = o * jnp.tanh(c)
        return h, c

    h0 = c0 = h1 = c1 = jnp.zeros((B, H), jnp.float32)
    for t in range(T):
        x_t = x[:, t, :]
        h0, c0 = cell(x_t, h0, c0, params["w_ih_l0"], params["w_hh_l0"],
                      params["b_ih_l0"], params["b_hh_l0"])
        h1, c1 = cell(h0, h1, c1, params["w_ih_l1"], params["w_hh_l1"],
                      params["b_ih_l1"], params["b_hh_l1"])
    return h1 @ params["fc_w"].T + params["fc_b"]


# ----------------------------------------------------------------------------
if __name__ == "__main__":
    B, T, D, H = 2, 8, 16, 32   # batch, seq_len, input_dim, hidden_dim (4H=128)

    key = jax.random.PRNGKey(0)
    k_x, k_p = jax.random.split(key)
    x = jax.random.normal(k_x, (B, T, D), jnp.float32)
    params = init_params(k_p, input_dim=D, hidden_dim=H)

    out = lstm_model_forward(x, params)
    out = jax.block_until_ready(out)

    ref = reference_forward(x, params)
    assert out.shape == (B, D), out.shape
    assert jnp.allclose(out, ref, rtol=1e-4, atol=1e-4), (
        f"max abs err {jnp.max(jnp.abs(out - ref))}")

    print("KERNEL_OK")
</pallas_src>

<mosaic_0001>
module attributes {stable_mosaic.version = 11 : i64} {
  func.func @lstm_kernel(%arg0: memref<16x16xf32, #tpu.memory_space<vmem>>, %arg1: memref<16x128xf32, #tpu.memory_space<vmem>>, %arg2: memref<1x128xf32, #tpu.memory_space<vmem>>, %arg3: memref<32x256xf32, #tpu.memory_space<vmem>>, %arg4: memref<32x128xf32, #tpu.memory_space<vmem>>, %arg5: memref<1x128xf32, #tpu.memory_space<vmem>>, %arg6: memref<32x16xf32, #tpu.memory_space<vmem>>, %arg7: memref<1x16xf32, #tpu.memory_space<vmem>>, %arg8: memref<2x16xf32, #tpu.memory_space<vmem>>) attributes {dimension_semantics = [], scalar_prefetch = 0 : i64, scratch_operands = 0 : i64, tpu.core_type = #tpu.core_type<tc>} {
    %c0 = arith.constant 0 : index
    %c0_0 = arith.constant 0 : index
    %0 = vector.load %arg0[%c0, %c0_0] : memref<16x16xf32, #tpu.memory_space<vmem>>, vector<16x16xf32>
    %c0_1 = arith.constant 0 : index
    %c0_2 = arith.constant 0 : index
    %1 = vector.load %arg1[%c0_1, %c0_2] : memref<16x128xf32, #tpu.memory_space<vmem>>, vector<16x128xf32>
    %cst = arith.constant dense<0.000000e+00> : vector<16x128xf32>
    %2 = tpu.matmul %0, %1, %cst {dimension_numbers = #tpu.dot_dimension_numbers<[1], [0], [0], [1], [0, 0, 1, 1], [], []>} : vector<16x16xf32>, vector<16x128xf32>, vector<16x128xf32> -> vector<16x128xf32>
    %c0_3 = arith.constant 0 : index
    %c0_4 = arith.constant 0 : index
    %3 = vector.load %arg2[%c0_3, %c0_4] : memref<1x128xf32, #tpu.memory_space<vmem>>, vector<1x128xf32>
    %4 = vector.broadcast %3 : vector<1x128xf32> to vector<16x128xf32>
    %5 = arith.addf %2, %4 : vector<16x128xf32>
    %c0_5 = arith.constant 0 : index
    %c0_6 = arith.constant 0 : index
    %6 = vector.load %arg5[%c0_5, %c0_6] : memref<1x128xf32, #tpu.memory_space<vmem>>, vector<1x128xf32>
    %7 = vector.shape_cast %6 : vector<1x128xf32> to vector<1x128xf32>
    %8 = vector.broadcast %7 : vector<1x128xf32> to vector<2x128xf32>
    %cst_7 = arith.constant 0.000000e+00 : f32
    %9 = vector.broadcast %cst_7 : f32 to vector<2x32xf32>
    %10 = vector.extract_strided_slice %5 {offsets = [0, 0], sizes = [2, 128], strides = [1, 1]} : vector<16x128xf32> to vector<2x128xf32>
    %11 = arith.negf %10 : vector<2x128xf32>
    %12 = math.exp %11 : vector<2x128xf32>
    %cst_8 = arith.constant 1.000000e+00 : f32
    %13 = vector.broadcast %cst_8 : f32 to vector<2x128xf32>
    %14 = arith.addf %13, %12 : vector<2x128xf32>
    %15 = arith.divf %13, %14 : vector<2x128xf32>
    %16 = vector.extract_strided_slice %10 {offsets = [0, 64], sizes = [2, 32], strides = [1, 1]} : vector<2x128xf32> to vector<2x32xf32>
    %17 = math.tanh %16 : vector<2x32xf32>
    %18 = vector.extract_strided_slice %15 {offsets = [0, 0], sizes = [2, 32], strides = [1, 1]} : vector<2x128xf32> to vector<2x32xf32>
    %19 = vector.extract_strided_slice %15 {offsets = [0, 32], sizes = [2, 32], strides = [1, 1]} : vector<2x128xf32> to vector<2x32xf32>
    %20 = vector.extract_strided_slice %15 {offsets = [0, 96], sizes = [2, 32], strides = [1, 1]} : vector<2x128xf32> to vector<2x32xf32>
    %21 = arith.mulf %19, %9 : vector<2x32xf32>
    %22 = arith.mulf %18, %17 : vector<2x32xf32>
    %23 = arith.addf %21, %22 : vector<2x32xf32>
    %24 = math.tanh %23 : vector<2x32xf32>
    %25 = arith.mulf %20, %24 : vector<2x32xf32>
    %c0_9 = arith.constant 0 : index
    %c0_10 = arith.constant 0 : index
    %26 = vector.load %arg3[%c0_9, %c0_10] : memref<32x256xf32, #tpu.memory_space<vmem>>, vector<32x256xf32>
    %cst_11 = arith.constant dense<0.000000e+00> : vector<2x256xf32>
    %27 = tpu.matmul %25, %26, %cst_11 {dimension_numbers = #tpu.dot_dimension_numbers<[1], [0], [0], [1], [0, 0, 1, 1], [], []>} : vector<2x32xf32>, vector<32x256xf32>, vector<2x256xf32> -> vector<2x256xf32>
    %c0_12 = arith.constant 0 : index
    %c0_13 = arith.constant 0 : index
    %28 = vector.load %arg4[%c0_12, %c0_13] : memref<32x128xf32, #tpu.memory_space<vmem>>, vector<32x128xf32>
    %cst_14 = arith.constant dense<0.000000e+00> : vector<2x128xf32>
    %29 = tpu.matmul %9, %28, %cst_14 {dimension_numbers = #tpu.dot_dimension_numbers<[1], [0], [0], [1], [0, 0, 1, 1], [], []>} : vector<2x32xf32>, vector<32x128xf32>, vector<2x128xf32> -> vector<2x128xf32>
    %30 = vector.extract_strided_slice %5 {offsets = [2, 0], sizes = [2, 128], strides = [1, 1]} : vector<16x128xf32> to vector<2x128xf32>
    %31 = vector.extract_strided_slice %27 {offsets = [0, 0], sizes = [2, 128], strides = [1, 1]} : vector<2x256xf32> to vector<2x128xf32>
    %32 = arith.addf %30, %31 : vector<2x128xf32>
    %33 = vector.extract_strided_slice %27 {offsets = [0, 128], sizes = [2, 128], strides = [1, 1]} : vector<2x256xf32> to vector<2x128xf32>
    %34 = arith.addf %33, %29 : vector<2x128xf32>
    %35 = arith.addf %34, %8 : vector<2x128xf32>
    %36 = tpu.concatenate %32, %35 in 0 : vector<2x128xf32>, vector<2x128xf32> -> vector<4x128xf32>
    %37 = tpu.concatenate %23, %9 in 0 : vector<2x32xf32>, vector<2x32xf32> -> vector<4x32xf32>
    %38 = arith.negf %36 : vector<4x128xf32>
    %39 = math.exp %38 : vector<4x128xf32>
    %cst_15 = arith.constant 1.000000e+00 : f32
    %40 = vector.broadcast %cst_15 : f32 to vector<4x128xf32>
    %41 = arith.addf %40, %39 : vector<4x128xf32>
    %42 = arith.divf %40, %41 : vector<4x128xf32>
    %43 = vector.extract_strided_slice %36 {offsets = [0, 64], sizes = [4, 32], strides = [1, 1]} : vector<4x128xf32> to vector<4x32xf32>
    %44 = math.tanh %43 : vector<4x32xf32>
    %45 = vector.extract_strided_slice %42 {offsets = [0, 0], sizes = [4, 32], strides = [1, 1]} : vector<4x128xf32> to vector<4x32xf32>
    %46 = vector.extract_strided_slice %42 {offsets = [0, 32], sizes = [4, 32], strides = [1, 1]} : vector<4x128xf32> to vector<4x32xf32>
    %47 = vector.extract_strided_slice %42 {offsets = [0, 96], sizes = [4, 32], strides = [1, 1]} : vector<4x128xf32> to vector<4x32xf32>
    %48 = arith.mulf %46, %37 : vector<4x32xf32>
    %49 = arith.mulf %45, %44 : vector<4x32xf32>
    %50 = arith.addf %48, %49 : vector<4x32xf32>
    %51 = math.tanh %50 : vector<4x32xf32>
    %52 = arith.mulf %47, %51 : vector<4x32xf32>
    %53 = vector.extract_strided_slice %52 {offsets = [0, 0], sizes = [2, 32], strides = [1, 1]} : vector<4x32xf32> to vector<2x32xf32>
    %54 = vector.extract_strided_slice %50 {offsets = [0, 0], sizes = [2, 32], strides = [1, 1]} : vector<4x32xf32> to vector<2x32xf32>
    %55 = vector.extract_strided_slice %52 {offsets = [2, 0], sizes = [2, 32], strides = [1, 1]} : vector<4x32xf32> to vector<2x32xf32>
    %56 = vector.extract_strided_slice %50 {offsets = [2, 0], sizes = [2, 32], strides = [1, 1]} : vector<4x32xf32> to vector<2x32xf32>
    %c0_16 = arith.constant 0 : index
    %c0_17 = arith.constant 0 : index
    %57 = vector.load %arg3[%c0_16, %c0_17] : memref<32x256xf32, #tpu.memory_space<vmem>>, vector<32x256xf32>
    %cst_18 = arith.constant dense<0.000000e+00> : vector<2x256xf32>
    %58 = tpu.matmul %53, %57, %cst_18 {dimension_numbers = #tpu.dot_dimension_numbers<[1], [0], [0], [1], [0, 0, 1, 1], [], []>} : vector<2x32xf32>, vector<32x256xf32>, vector<2x256xf32> -> vector<2x256xf32>
    %c0_19 = arith.constant 0 : index
    %c0_20 = arith.constant 0 : index
    %59 = vector.load %arg4[%c0_19, %c0_20] : memref<32x128xf32, #tpu.memory_space<vmem>>, vector<32x128xf32>
    %cst_21 = arith.constant dense<0.000000e+00> : vector<2x128xf32>
    %60 = tpu.matmul %55, %59, %cst_21 {dimension_numbers = #tpu.dot_dimension_numbers<[1], [0], [0], [1], [0, 0, 1, 1], [], []>} : vector<2x32xf32>, vector<32x128xf32>, vector<2x128xf32> -> vector<2x128xf32>
    %61 = vector.extract_strided_slice %5 {offsets = [4, 0], sizes = [2, 128], strides = [1, 1]} : vector<16x128xf32> to vector<2x128xf32>
    %62 = vector.extract_strided_slice %58 {offsets = [0, 0], sizes = [2, 128], strides = [1, 1]} : vector<2x256xf32> to vector<2x128xf32>
    %63 = arith.addf %61, %62 : vector<2x128xf32>
    %64 = vector.extract_strided_slice %58 {offsets = [0, 128], sizes = [2, 128], strides = [1, 1]} : vector<2x256xf32> to vector<2x128xf32>
    %65 = arith.addf %64, %60 : vector<2x128xf32>
    %66 = arith.addf %65, %8 : vector<2x128xf32>
    %67 = tpu.concatenate %63, %66 in 0 : vector<2x128xf32>, vector<2x128xf32> -> vector<4x128xf32>
    %68 = tpu.concatenate %54, %56 in 0 : vector<2x32xf32>, vector<2x32xf32> -> vector<4x32xf32>
    %69 = arith.negf %67 : vector<4x128xf32>
    %70 = math.exp %69 : vector<4x128xf32>
    %cst_22 = arith.constant 1.000000e+00 : f32
    %71 = vector.broadcast %cst_22 : f32 to vector<4x128xf32>
    %72 = arith.addf %71, %70 : vector<4x128xf32>
    %73 = arith.divf %71, %72 : vector<4x128xf32>
    %74 = vector.extract_strided_slice %67 {offsets = [0, 64], sizes = [4, 32], strides = [1, 1]} : vector<4x128xf32> to vector<4x32xf32>
    %75 = math.tanh %74 : vector<4x32xf32>
    %76 = vector.extract_strided_slice %73 {offsets = [0, 0], sizes = [4, 32], strides = [1, 1]} : vector<4x128xf32> to vector<4x32xf32>
    %77 = vector.extract_strided_slice %73 {offsets = [0, 32], sizes = [4, 32], strides = [1, 1]} : vector<4x128xf32> to vector<4x32xf32>
    %78 = vector.extract_strided_slice %73 {offsets = [0, 96], sizes = [4, 32], strides = [1, 1]} : vector<4x128xf32> to vector<4x32xf32>
    %79 = arith.mulf %77, %68 : vector<4x32xf32>
    %80 = arith.mulf %76, %75 : vector<4x32xf32>
    %81 = arith.addf %79, %80 : vector<4x32xf32>
    %82 = math.tanh %81 : vector<4x32xf32>
    %83 = arith.mulf %78, %82 : vector<4x32xf32>
    %84 = vector.extract_strided_slice %83 {offsets = [0, 0], sizes = [2, 32], strides = [1, 1]} : vector<4x32xf32> to vector<2x32xf32>
    %85 = vector.extract_strided_slice %81 {offsets = [0, 0], sizes = [2, 32], strides = [1, 1]} : vector<4x32xf32> to vector<2x32xf32>
    %86 = vector.extract_strided_slice %83 {offsets = [2, 0], sizes = [2, 32], strides = [1, 1]} : vector<4x32xf32> to vector<2x32xf32>
    %87 = vector.extract_strided_slice %81 {offsets = [2, 0], sizes = [2, 32], strides = [1, 1]} : vector<4x32xf32> to vector<2x32xf32>
    %c0_23 = arith.constant 0 : index
    %c0_24 = arith.constant 0 : index
    %88 = vector.load %arg3[%c0_23, %c0_24] : memref<32x256xf32, #tpu.memory_space<vmem>>, vector<32x256xf32>
    %cst_25 = arith.constant dense<0.000000e+00> : vector<2x256xf32>
    %89 = tpu.matmul %84, %88, %cst_25 {dimension_numbers = #tpu.dot_dimension_numbers<[1], [0], [0], [1], [0, 0, 1, 1], [], []>} : vector<2x32xf32>, vector<32x256xf32>, vector<2x256xf32> -> vector<2x256xf32>
    %c0_26 = arith.constant 0 : index
    %c0_27 = arith.constant 0 : index
    %90 = vector.load %arg4[%c0_26, %c0_27] : memref<32x128xf32, #tpu.memory_space<vmem>>, vector<32x128xf32>
    %cst_28 = arith.constant dense<0.000000e+00> : vector<2x128xf32>
    %91 = tpu.matmul %86, %90, %cst_28 {dimension_numbers = #tpu.dot_dimension_numbers<[1], [0], [0], [1], [0, 0, 1, 1], [], []>} : vector<2x32xf32>, vector<32x128xf32>, vector<2x128xf32> -> vector<2x128xf32>
    %92 = vector.extract_strided_slice %5 {offsets = [6, 0], sizes = [2, 128], strides = [1, 1]} : vector<16x128xf32> to vector<2x128xf32>
    %93 = vector.extract_strided_slice %89 {offsets = [0, 0], sizes = [2, 128], strides = [1, 1]} : vector<2x256xf32> to vector<2x128xf32>
    %94 = arith.addf %92, %93 : vector<2x128xf32>
    %95 = vector.extract_strided_slice %89 {offsets = [0, 128], sizes = [2, 128], strides = [1, 1]} : vector<2x256xf32> to vector<2x128xf32>
    %96 = arith.addf %95, %91 : vector<2x128xf32>
    %97 = arith.addf %96, %8 : vector<2x128xf32>
    %98 = tpu.concatenate %94, %97 in 0 : vector<2x128xf32>, vector<2x128xf32> -> vector<4x128xf32>
    %99 = tpu.concatenate %85, %87 in 0 : vector<2x32xf32>, vector<2x32xf32> -> vector<4x32xf32>
    %100 = arith.negf %98 : vector<4x128xf32>
    %101 = math.exp %100 : vector<4x128xf32>
    %cst_29 = arith.constant 1.000000e+00 : f32
    %102 = vector.broadcast %cst_29 : f32 to vector<4x128xf32>
    %103 = arith.addf %102, %101 : vector<4x128xf32>
    %104 = arith.divf %102, %103 : vector<4x128xf32>
    %105 = vector.extract_strided_slice %98 {offsets = [0, 64], sizes = [4, 32], strides = [1, 1]} : vector<4x128xf32> to vector<4x32xf32>
    %106 = math.tanh %105 : vector<4x32xf32>
    %107 = vector.extract_strided_slice %104 {offsets = [0, 0], sizes = [4, 32], strides = [1, 1]} : vector<4x128xf32> to vector<4x32xf32>
    %108 = vector.extract_strided_slice %104 {offsets = [0, 32], sizes = [4, 32], strides = [1, 1]} : vector<4x128xf32> to vector<4x32xf32>
    %109 = vector.extract_strided_slice %104 {offsets = [0, 96], sizes = [4, 32], strides = [1, 1]} : vector<4x128xf32> to vector<4x32xf32>
    %110 = arith.mulf %108, %99 : vector<4x32xf32>
    %111 = arith.mulf %107, %106 : vector<4x32xf32>
    %112 = arith.addf %110, %111 : vector<4x32xf32>
    %113 = math.tanh %112 : vector<4x32xf32>
    %114 = arith.mulf %109, %113 : vector<4x32xf32>
    %115 = vector.extract_strided_slice %114 {offsets = [0, 0], sizes = [2, 32], strides = [1, 1]} : vector<4x32xf32> to vector<2x32xf32>
    %116 = vector.extract_strided_slice %112 {offsets = [0, 0], sizes = [2, 32], strides = [1, 1]} : vector<4x32xf32> to vector<2x32xf32>
    %117 = vector.extract_strided_slice %114 {offsets = [2, 0], sizes = [2, 32], strides = [1, 1]} : vector<4x32xf32> to vector<2x32xf32>
    %118 = vector.extract_strided_slice %112 {offsets = [2, 0], sizes = [2, 32], strides = [1, 1]} : vector<4x32xf32> to vector<2x32xf32>
    %c0_30 = arith.constant 0 : index
    %c0_31 = arith.constant 0 : index
    %119 = vector.load %arg3[%c0_30, %c0_31] : memref<32x256xf32, #tpu.memory_space<vmem>>, vector<32x256xf32>
    %cst_32 = arith.constant dense<0.000000e+00> : vector<2x256xf32>
    %120 = tpu.matmul %115, %119, %cst_32 {dimension_numbers = #tpu.dot_dimension_numbers<[1], [0], [0], [1], [0, 0, 1, 1], [], []>} : vector<2x32xf32>, vector<32x256xf32>, vector<2x256xf32> -> vector<2x256xf32>
    %c0_33 = arith.constant 0 : index
    %c0_34 = arith.constant 0 : index
    %121 = vector.load %arg4[%c0_33, %c0_34] : memref<32x128xf32, #tpu.memory_space<vmem>>, vector<32x128xf32>
    %cst_35 = arith.constant dense<0.000000e+00> : vector<2x128xf32>
    %122 = tpu.matmul %117, %121, %cst_35 {dimension_numbers = #tpu.dot_dimension_numbers<[1], [0], [0], [1], [0, 0, 1, 1], [], []>} : vector<2x32xf32>, vector<32x128xf32>, vector<2x128xf32> -> vector<2x128xf32>
    %123 = vector.extract_strided_slice %5 {offsets = [8, 0], sizes = [2, 128], strides = [1, 1]} : vector<16x128xf32> to vector<2x128xf32>
    %124 = vector.extract_strided_slice %120 {offsets = [0, 0], sizes = [2, 128], strides = [1, 1]} : vector<2x256xf32> to vector<2x128xf32>
    %125 = arith.addf %123, %124 : vector<2x128xf32>
    %126 = vector.extract_strided_slice %120 {offsets = [0, 128], sizes = [2, 128], strides = [1, 1]} : vector<2x256xf32> to vector<2x128xf32>
    %127 = arith.addf %126, %122 : vector<2x128xf32>
    %128 = arith.addf %127, %8 : vector<2x128xf32>
    %129 = tpu.concatenate %125, %128 in 0 : vector<2x128xf32>, vector<2x128xf32> -> vector<4x128xf32>
    %130 = tpu.concatenate %116, %118 in 0 : vector<2x32xf32>, vector<2x32xf32> -> vector<4x32xf32>
    %131 = arith.negf %129 : vector<4x128xf32>
    %132 = math.exp %131 : vector<4x128xf32>
    %cst_36 = arith.constant 1.000000e+00 : f32
    %133 = vector.broadcast %cst_36 : f32 to vector<4x128xf32>
    %134 = arith.addf %133, %132 : vector<4x128xf32>
    %135 = arith.divf %133, %134 : vector<4x128xf32>
    %136 = vector.extract_strided_slice %129 {offsets = [0, 64], sizes = [4, 32], strides = [1, 1]} : vector<4x128xf32> to vector<4x32xf32>
    %137 = math.tanh %136 : vector<4x32xf32>
    %138 = vector.extract_strided_slice %135 {offsets = [0, 0], sizes = [4, 32], strides = [1, 1]} : vector<4x128xf32> to vector<4x32xf32>
    %139 = vector.extract_strided_slice %135 {offsets = [0, 32], sizes = [4, 32], strides = [1, 1]} : vector<4x128xf32> to vector<4x32xf32>
    %140 = vector.extract_strided_slice %135 {offsets = [0, 96], sizes = [4, 32], strides = [1, 1]} : vector<4x128xf32> to vector<4x32xf32>
    %141 = arith.mulf %139, %130 : vector<4x32xf32>
    %142 = arith.mulf %138, %137 : vector<4x32xf32>
    %143 = arith.addf %141, %142 : vector<4x32xf32>
    %144 = math.tanh %143 : vector<4x32xf32>
    %145 = arith.mulf %140, %144 : vector<4x32xf32>
    %146 = vector.extract_strided_slice %145 {offsets = [0, 0], sizes = [2, 32], strides = [1, 1]} : vector<4x32xf32> to vector<2x32xf32>
    %147 = vector.extract_strided_slice %143 {offsets = [0, 0], sizes = [2, 32], strides = [1, 1]} : vector<4x32xf32> to vector<2x32xf32>
    %148 = vector.extract_strided_slice %145 {offsets = [2, 0], sizes = [2, 32], strides = [1, 1]} : vector<4x32xf32> to vector<2x32xf32>
    %149 = vector.extract_strided_slice %143 {offsets = [2, 0], sizes = [2, 32], strides = [1, 1]} : vector<4x32xf32> to vector<2x32xf32>
    %c0_37 = arith.constant 0 : index
    %c0_38 = arith.constant 0 : index
    %150 = vector.load %arg3[%c0_37, %c0_38] : memref<32x256xf32, #tpu.memory_space<vmem>>, vector<32x256xf32>
    %cst_39 = arith.constant dense<0.000000e+00> : vector<2x256xf32>
    %151 = tpu.matmul %146, %150, %cst_39 {dimension_numbers = #tpu.dot_dimension_numbers<[1], [0], [0], [1], [0, 0, 1, 1], [], []>} : vector<2x32xf32>, vector<32x256xf32>, vector<2x256xf32> -> vector<2x256xf32>
    %c0_40 = arith.constant 0 : index
    %c0_41 = arith.constant 0 : index
    %152 = vector.load %arg4[%c0_40, %c0_41] : memref<32x128xf32, #tpu.memory_space<vmem>>, vector<32x128xf32>
    %cst_42 = arith.constant dense<0.000000e+00> : vector<2x128xf32>
    %153 = tpu.matmul %148, %152, %cst_42 {dimension_numbers = #tpu.dot_dimension_numbers<[1], [0], [0], [1], [0, 0, 1, 1], [], []>} : vector<2x32xf32>, vector<32x128xf32>, vector<2x128xf32> -> vector<2x128xf32>
    %154 = vector.extract_strided_slice %5 {offsets = [10, 0], sizes = [2, 128], strides = [1, 1]} : vector<16x128xf32> to vector<2x128xf32>
    %155 = vector.extract_strided_slice %151 {offsets = [0, 0], sizes = [2, 128], strides = [1, 1]} : vector<2x256xf32> to vector<2x128xf32>
    %156 = arith.addf %154, %155 : vector<2x128xf32>
    %157 = vector.extract_strided_slice %151 {offsets = [0, 128], sizes = [2, 128], strides = [1, 1]} : vector<2x256xf32> to vector<2x128xf32>
    %158 = arith.addf %157, %153 : vector<2x128xf32>
    %159 = arith.addf %158, %8 : vector<2x128xf32>
    %160 = tpu.concatenate %156, %159 in 0 : vector<2x128xf32>, vector<2x128xf32> -> vector<4x128xf32>
    %161 = tpu.concatenate %147, %149 in 0 : vector<2x32xf32>, vector<2x32xf32> -> vector<4x32xf32>
    %162 = arith.negf %160 : vector<4x128xf32>
    %163 = math.exp %162 : vector<4x128xf32>
    %cst_43 = arith.constant 1.000000e+00 : f32
    %164 = vector.broadcast %cst_43 : f32 to vector<4x128xf32>
    %165 = arith.addf %164, %163 : vector<4x128xf32>
    %166 = arith.divf %164, %165 : vector<4x128xf32>
    %167 = vector.extract_strided_slice %160 {offsets = [0, 64], sizes = [4, 32], strides = [1, 1]} : vector<4x128xf32> to vector<4x32xf32>
    %168 = math.tanh %167 : vector<4x32xf32>
    %169 = vector.extract_strided_slice %166 {offsets = [0, 0], sizes = [4, 32], strides = [1, 1]} : vector<4x128xf32> to vector<4x32xf32>
    %170 = vector.extract_strided_slice %166 {offsets = [0, 32], sizes = [4, 32], strides = [1, 1]} : vector<4x128xf32> to vector<4x32xf32>
    %171 = vector.extract_strided_slice %166 {offsets = [0, 96], sizes = [4, 32], strides = [1, 1]} : vector<4x128xf32> to vector<4x32xf32>
    %172 = arith.mulf %170, %161 : vector<4x32xf32>
    %173 = arith.mulf %169, %168 : vector<4x32xf32>
    %174 = arith.addf %172, %173 : vector<4x32xf32>
    %175 = math.tanh %174 : vector<4x32xf32>
    %176 = arith.mulf %171, %175 : vector<4x32xf32>
    %177 = vector.extract_strided_slice %176 {offsets = [0, 0], sizes = [2, 32], strides = [1, 1]} : vector<4x32xf32> to vector<2x32xf32>
    %178 = vector.extract_strided_slice %174 {offsets = [0, 0], sizes = [2, 32], strides = [1, 1]} : vector<4x32xf32> to vector<2x32xf32>
    %179 = vector.extract_strided_slice %176 {offsets = [2, 0], sizes = [2, 32], strides = [1, 1]} : vector<4x32xf32> to vector<2x32xf32>
    %180 = vector.extract_strided_slice %174 {offsets = [2, 0], sizes = [2, 32], strides = [1, 1]} : vector<4x32xf32> to vector<2x32xf32>
    %c0_44 = arith.constant 0 : index
    %c0_45 = arith.constant 0 : index
    %181 = vector.load %arg3[%c0_44, %c0_45] : memref<32x256xf32, #tpu.memory_space<vmem>>, vector<32x256xf32>
    %cst_46 = arith.constant dense<0.000000e+00> : vector<2x256xf32>
    %182 = tpu.matmul %177, %181, %cst_46 {dimension_numbers = #tpu.dot_dimension_numbers<[1], [0], [0], [1], [0, 0, 1, 1], [], []>} : vector<2x32xf32>, vector<32x256xf32>, vector<2x256xf32> -> vector<2x256xf32>
    %c0_47 = arith.constant 0 : index
    %c0_48 = arith.constant 0 : index
    %183 = vector.load %arg4[%c0_47, %c0_48] : memref<32x128xf32, #tpu.memory_space<vmem>>, vector<32x128xf32>
    %cst_49 = arith.constant dense<0.000000e+00> : vector<2x128xf32>
    %184 = tpu.matmul %179, %183, %cst_49 {dimension_numbers = #tpu.dot_dimension_numbers<[1], [0], [0], [1], [0, 0, 1, 1], [], []>} : vector<2x32xf32>, vector<32x128xf32>, vector<2x128xf32> -> vector<2x128xf32>
    %185 = vector.extract_strided_slice %5 {offsets = [12, 0], sizes = [2, 128], strides = [1, 1]} : vector<16x128xf32> to vector<2x128xf32>
    %186 = vector.extract_strided_slice %182 {offsets = [0, 0], sizes = [2, 128], strides = [1, 1]} : vector<2x256xf32> to vector<2x128xf32>
    %187 = arith.addf %185, %186 : vector<2x128xf32>
    %188 = vector.extract_strided_slice %182 {offsets = [0, 128], sizes = [2, 128], strides = [1, 1]} : vector<2x256xf32> to vector<2x128xf32>
    %189 = arith.addf %188, %184 : vector<2x128xf32>
    %190 = arith.addf %189, %8 : vector<2x128xf32>
    %191 = tpu.concatenate %187, %190 in 0 : vector<2x128xf32>, vector<2x128xf32> -> vector<4x128xf32>
    %192 = tpu.concatenate %178, %180 in 0 : vector<2x32xf32>, vector<2x32xf32> -> vector<4x32xf32>
    %193 = arith.negf %191 : vector<4x128xf32>
    %194 = math.exp %193 : vector<4x128xf32>
    %cst_50 = arith.constant 1.000000e+00 : f32
    %195 = vector.broadcast %cst_50 : f32 to vector<4x128xf32>
    %196 = arith.addf %195, %194 : vector<4x128xf32>
    %197 = arith.divf %195, %196 : vector<4x128xf32>
    %198 = vector.extract_strided_slice %191 {offsets = [0, 64], sizes = [4, 32], strides = [1, 1]} : vector<4x128xf32> to vector<4x32xf32>
    %199 = math.tanh %198 : vector<4x32xf32>
    %200 = vector.extract_strided_slice %197 {offsets = [0, 0], sizes = [4, 32], strides = [1, 1]} : vector<4x128xf32> to vector<4x32xf32>
    %201 = vector.extract_strided_slice %197 {offsets = [0, 32], sizes = [4, 32], strides = [1, 1]} : vector<4x128xf32> to vector<4x32xf32>
    %202 = vector.extract_strided_slice %197 {offsets = [0, 96], sizes = [4, 32], strides = [1, 1]} : vector<4x128xf32> to vector<4x32xf32>
    %203 = arith.mulf %201, %192 : vector<4x32xf32>
    %204 = arith.mulf %200, %199 : vector<4x32xf32>
    %205 = arith.addf %203, %204 : vector<4x32xf32>
    %206 = math.tanh %205 : vector<4x32xf32>
    %207 = arith.mulf %202, %206 : vector<4x32xf32>
    %208 = vector.extract_strided_slice %207 {offsets = [0, 0], sizes = [2, 32], strides = [1, 1]} : vector<4x32xf32> to vector<2x32xf32>
    %209 = vector.extract_strided_slice %205 {offsets = [0, 0], sizes = [2, 32], strides = [1, 1]} : vector<4x32xf32> to vector<2x32xf32>
    %210 = vector.extract_strided_slice %207 {offsets = [2, 0], sizes = [2, 32], strides = [1, 1]} : vector<4x32xf32> to vector<2x32xf32>
    %211 = vector.extract_strided_slice %205 {offsets = [2, 0], sizes = [2, 32], strides = [1, 1]} : vector<4x32xf32> to vector<2x32xf32>
    %c0_51 = arith.constant 0 : index
    %c0_52 = arith.constant 0 : index
    %212 = vector.load %arg3[%c0_51, %c0_52] : memref<32x256xf32, #tpu.memory_space<vmem>>, vector<32x256xf32>
    %cst_53 = arith.constant dense<0.000000e+00> : vector<2x256xf32>
    %213 = tpu.matmul %208, %212, %cst_53 {dimension_numbers = #tpu.dot_dimension_numbers<[1], [0], [0], [1], [0, 0, 1, 1], [], []>} : vector<2x32xf32>, vector<32x256xf32>, vector<2x256xf32> -> vector<2x256xf32>
    %c0_54 = arith.constant 0 : index
    %c0_55 = arith.constant 0 : index
    %214 = vector.load %arg4[%c0_54, %c0_55] : memref<32x128xf32, #tpu.memory_space<vmem>>, vector<32x128xf32>
    %cst_56 = arith.constant dense<0.000000e+00> : vector<2x128xf32>
    %215 = tpu.matmul %210, %214, %cst_56 {dimension_numbers = #tpu.dot_dimension_numbers<[1], [0], [0], [1], [0, 0, 1, 1], [], []>} : vector<2x32xf32>, vector<32x128xf32>, vector<2x128xf32> -> vector<2x128xf32>
    %216 = vector.extract_strided_slice %5 {offsets = [14, 0], sizes = [2, 128], strides = [1, 1]} : vector<16x128xf32> to vector<2x128xf32>
    %217 = vector.extract_strided_slice %213 {offsets = [0, 0], sizes = [2, 128], strides = [1, 1]} : vector<2x256xf32> to vector<2x128xf32>
    %218 = arith.addf %216, %217 : vector<2x128xf32>
    %219 = vector.extract_strided_slice %213 {offsets = [0, 128], sizes = [2, 128], strides = [1, 1]} : vector<2x256xf32> to vector<2x128xf32>
    %220 = arith.addf %219, %215 : vector<2x128xf32>
    %221 = arith.addf %220, %8 : vector<2x128xf32>
    %222 = tpu.concatenate %218, %221 in 0 : vector<2x128xf32>, vector<2x128xf32> -> vector<4x128xf32>
    %223 = tpu.concatenate %209, %211 in 0 : vector<2x32xf32>, vector<2x32xf32> -> vector<4x32xf32>
    %224 = arith.negf %222 : vector<4x128xf32>
    %225 = math.exp %224 : vector<4x128xf32>
    %cst_57 = arith.constant 1.000000e+00 : f32
    %226 = vector.broadcast %cst_57 : f32 to vector<4x128xf32>
    %227 = arith.addf %226, %225 : vector<4x128xf32>
    %228 = arith.divf %226, %227 : vector<4x128xf32>
    %229 = vector.extract_strided_slice %222 {offsets = [0, 64], sizes = [4, 32], strides = [1, 1]} : vector<4x128xf32> to vector<4x32xf32>
    %230 = math.tanh %229 : vector<4x32xf32>
    %231 = vector.extract_strided_slice %228 {offsets = [0, 0], sizes = [4, 32], strides = [1, 1]} : vector<4x128xf32> to vector<4x32xf32>
    %232 = vector.extract_strided_slice %228 {offsets = [0, 32], sizes = [4, 32], strides = [1, 1]} : vector<4x128xf32> to vector<4x32xf32>
    %233 = vector.extract_strided_slice %228 {offsets = [0, 96], sizes = [4, 32], strides = [1, 1]} : vector<4x128xf32> to vector<4x32xf32>
    %234 = arith.mulf %232, %223 : vector<4x32xf32>
    %235 = arith.mulf %231, %230 : vector<4x32xf32>
    %236 = arith.addf %234, %235 : vector<4x32xf32>
    %237 = math.tanh %236 : vector<4x32xf32>
    %238 = arith.mulf %233, %237 : vector<4x32xf32>
    %239 = vector.extract_strided_slice %238 {offsets = [0, 0], sizes = [2, 32], strides = [1, 1]} : vector<4x32xf32> to vector<2x32xf32>
    %240 = vector.extract_strided_slice %238 {offsets = [2, 0], sizes = [2, 32], strides = [1, 1]} : vector<4x32xf32> to vector<2x32xf32>
    %241 = vector.extract_strided_slice %236 {offsets = [2, 0], sizes = [2, 32], strides = [1, 1]} : vector<4x32xf32> to vector<2x32xf32>
    %c0_58 = arith.constant 0 : index
    %c128 = arith.constant 128 : index
    %242 = vector.load %arg3[%c0_58, %c128] : memref<32x256xf32, #tpu.memory_space<vmem>>, vector<32x128xf32>
    %cst_59 = arith.constant dense<0.000000e+00> : vector<2x128xf32>
    %243 = tpu.matmul %239, %242, %cst_59 {dimension_numbers = #tpu.dot_dimension_numbers<[1], [0], [0], [1], [0, 0, 1, 1], [], []>} : vector<2x32xf32>, vector<32x128xf32>, vector<2x128xf32> -> vector<2x128xf32>
    %c0_60 = arith.constant 0 : index
    %c0_61 = arith.constant 0 : index
    %244 = vector.load %arg4[%c0_60, %c0_61] : memref<32x128xf32, #tpu.memory_space<vmem>>, vector<32x128xf32>
    %cst_62 = arith.constant dense<0.000000e+00> : vector<2x128xf32>
    %245 = tpu.matmul %240, %244, %cst_62 {dimension_numbers = #tpu.dot_dimension_numbers<[1], [0], [0], [1], [0, 0, 1, 1], [], []>} : vector<2x32xf32>, vector<32x128xf32>, vector<2x128xf32> -> vector<2x128xf32>
    %246 = arith.addf %243, %245 : vector<2x128xf32>
    %247 = arith.addf %246, %8 : vector<2x128xf32>
    %248 = arith.negf %247 : vector<2x128xf32>
    %249 = math.exp %248 : vector<2x128xf32>
    %cst_63 = arith.constant 1.000000e+00 : f32
    %250 = vector.broadcast %cst_63 : f32 to vector<2x128xf32>
    %251 = arith.addf %250, %249 : vector<2x128xf32>
    %252 = arith.divf %250, %251 : vector<2x128xf32>
    %253 = vector.extract_strided_slice %247 {offsets = [0, 64], sizes = [2, 32], strides = [1, 1]} : vector<2x128xf32> to vector<2x32xf32>
    %254 = math.tanh %253 : vector<2x32xf32>
    %255 = vector.extract_strided_slice %252 {offsets = [0, 0], sizes = [2, 32], strides = [1, 1]} : vector<2x128xf32> to vector<2x32xf32>
    %256 = vector.extract_strided_slice %252 {offsets = [0, 32], sizes = [2, 32], strides = [1, 1]} : vector<2x128xf32> to vector<2x32xf32>
    %257 = vector.extract_strided_slice %252 {offsets = [0, 96], sizes = [2, 32], strides = [1, 1]} : vector<2x128xf32> to vector<2x32xf32>
    %258 = arith.mulf %256, %241 : vector<2x32xf32>
    %259 = arith.mulf %255, %254 : vector<2x32xf32>
    %260 = arith.addf %258, %259 : vector<2x32xf32>
    %261 = math.tanh %260 : vector<2x32xf32>
    %262 = arith.mulf %257, %261 : vector<2x32xf32>
    %c0_64 = arith.constant 0 : index
    %c0_65 = arith.constant 0 : index
    %263 = vector.load %arg6[%c0_64, %c0_65] : memref<32x16xf32, #tpu.memory_space<vmem>>, vector<32x16xf32>
    %cst_66 = arith.constant dense<0.000000e+00> : vector<2x16xf32>
    %264 = tpu.matmul %262, %263, %cst_66 {dimension_numbers = #tpu.dot_dimension_numbers<[1], [0], [0], [1], [0, 0, 1, 1], [], []>} : vector<2x32xf32>, vector<32x16xf32>, vector<2x16xf32> -> vector<2x16xf32>
    %c0_67 = arith.constant 0 : index
    %c0_68 = arith.constant 0 : index
    %265 = vector.load %arg7[%c0_67, %c0_68] : memref<1x16xf32, #tpu.memory_space<vmem>>, vector<1x16xf32>
    %266 = vector.broadcast %265 : vector<1x16xf32> to vector<2x16xf32>
    %267 = arith.addf %264, %266 : vector<2x16xf32>
    %c0_69 = arith.constant 0 : index
    %c0_70 = arith.constant 0 : index
    %268 = vector.load %arg8[%c0_69, %c0_70] : memref<2x16xf32, #tpu.memory_space<vmem>>, vector<2x16xf32>
    tpu.vector_store %arg8[%c0_69, %c0_70], %267 {strides = array<i32>} : memref<2x16xf32, #tpu.memory_space<vmem>>, vector<2x16xf32>,
    return
  }
}

</mosaic_0001>

<llo_original>
// kernel: lstm_model_forward.1
$region0: #{lstm_model_forward.1}
  #allocation0 [shape = 'u32[]', space=smem, size = 0x4, offset = 0x4, fixed_abs, tag = 'smem constant byte address 0x4 - core index']
  #allocation1 [shape = 'u32[144,128]{1,0:T(1,128)}', space=vmem, size = 0x12000, scoped, tag = 'internal scratch']
  %s0 = inlined_call_operand.vmem [shape: f32[16,16], index: 0, kind: input, shape index: {}]
  %s1 = inlined_call_operand.vmem [shape: f32[16,128], index: 1, kind: input, shape index: {}]
  %s2 = inlined_call_operand.vmem [shape: f32[1,128], index: 2, kind: input, shape index: {}]
  %s3 = inlined_call_operand.vmem [shape: f32[32,256], index: 3, kind: input, shape index: {}]
  %s4 = inlined_call_operand.vmem [shape: f32[32,128], index: 4, kind: input, shape index: {}]
  %s5 = inlined_call_operand.vmem [shape: f32[1,128], index: 5, kind: input, shape index: {}]
  %s6 = inlined_call_operand.vmem [shape: f32[32,16], index: 6, kind: input, shape index: {}]
  %s7 = inlined_call_operand.vmem [shape: f32[1,16], index: 7, kind: input, shape index: {}]
  %s8 = inlined_call_operand.hbm [shape: f32[2,16], index: 8, kind: output, shape index: {}]
  %s9 = sld [smem:[#allocation0]]
  $region42: #{lstm_model_forward.1} parent=0
    _
  %s11 = ssub.s32 1, %s9
  %s12 = scalar_select 0, %s11, %s9
  $region1: #{lstm_model_forward.1} parent=0
    #allocation2 [shape = 'u8[1024]{0}', space=vmem, size = 0x400, scoped, tag = 'output window, operand 0, single buffered']
    #allocation3 [shape = 's32[1]{0}', space=sflag, size = 0x4, scoped, tag = 'scoped memory for lstm_model_forward.1']
    %13 = vsyncpa [#allocation3], 0
    // Predicated region
    $region2: #{lstm_model_forward.1} parent=1 // pred_check
      _
    $region3: #{lstm_model_forward.1} parent=1 // pred_check_branch
      %15 = sbr.rel (0) target = $region5
    $region4: #{lstm_model_forward.1} parent=1 // pred_region
      _
    $region5: #{lstm_model_forward.1} parent=1 // pred_fallthru
      _
    // Predicated region
    $region6: #{lstm_model_forward.1} parent=1 // pred_check
      _
    $region7: #{lstm_model_forward.1} parent=1 // pred_check_branch
      %17 = sbr.rel (0) target = $region9
    $region8: #{lstm_model_forward.1} parent=1 // pred_region
      _
    $region9: #{lstm_model_forward.1} parent=1 // pred_fallthru
      _
    // Predicated region
    $region10: #{lstm_model_forward.1} parent=1 // pred_check
      _
    $region11: #{lstm_model_forward.1} parent=1 // pred_check_branch
      %19 = sbr.rel (0) target = $region13
    $region12: #{lstm_model_forward.1} parent=1 // pred_region
      _
    $region13: #{lstm_model_forward.1} parent=1 // pred_fallthru
      _
    // Predicated region
    $region14: #{lstm_model_forward.1} parent=1 // pred_check
      _
    $region15: #{lstm_model_forward.1} parent=1 // pred_check_branch
      %21 = sbr.rel (0) target = $region17
    $region16: #{lstm_model_forward.1} parent=1 // pred_region
      _
    $region17: #{lstm_model_forward.1} parent=1 // pred_fallthru
      _
    // Predicated region
    $region18: #{lstm_model_forward.1} parent=1 // pred_check
      _
    $region19: #{lstm_model_forward.1} parent=1 // pred_check_branch
      %23 = sbr.rel (0) target = $region21
    $region20: #{lstm_model_forward.1} parent=1 // pred_region
      _
    $region21: #{lstm_model_forward.1} parent=1 // pred_fallthru
      _
    // Predicated region
    $region22: #{lstm_model_forward.1} parent=1 // pred_check
      _
    $region23: #{lstm_model_forward.1} parent=1 // pred_check_branch
      %25 = sbr.rel (0) target = $region25
    $region24: #{lstm_model_forward.1} parent=1 // pred_region
      _
    $region25: #{lstm_model_forward.1} parent=1 // pred_fallthru
      _
    // Predicated region
    $region26: #{lstm_model_forward.1} parent=1 // pred_check
      _
    $region27: #{lstm_model_forward.1} parent=1 // pred_check_branch
      %27 = sbr.rel (0) target = $region29
    $region28: #{lstm_model_forward.1} parent=1 // pred_region
      _
    $region29: #{lstm_model_forward.1} parent=1 // pred_fallthru
      _
    // Predicated region
    $region30: #{lstm_model_forward.1} parent=1 // pred_check
      _
    $region31: #{lstm_model_forward.1} parent=1 // pred_check_branch
      %29 = sbr.rel (0) target = $region33
    $region32: #{lstm_model_forward.1} parent=1 // pred_region
      _
    $region33: #{lstm_model_forward.1} parent=1 // pred_fallthru
      _
    %v30 = vld [vmem:[%s0] sm:$0xff]
    %v31 = vld [vmem:[%s0 + $0x8] sm:$0xff]
    %v32 = vld [vmem:[%s1] sm:$0xff]
    %v33 = vld [vmem:[%s1 + $0x8] sm:$0xff]
    %v34 = vld [vmem:[%s2] sm:$0x1]
    %v36 = vlaneseq
    %v37 = vshrl.u32 %v36, 7
    %v38 = vsub.s32 0, %v37
    %v39 = vrot.slane %v34, %v38
    %vm41 = vcmask 130048
    %v43 = vsel %vm41, %v30, 0
    %v46 = vsel %vm41, %v31, 0
    %48 = vmatprep.subr.mxu0 0.0
    %49 = vmatpush1.msra.mxu0 %v32
    %50 = vmatprep.subr.mxu0 0.0
    %51 = vmatpush1.msra.mxu0 %v33
    %52 = vmatprep.subr.mxu0 0.0
    %53 = vmatpush1.msra.mxu0 0.0
    %54 = vmatprep.subr.mxu0 0.0
    %55 = vmatpush1.msra.mxu0 0.0
    %56 = vmatprep.subr.mxu0 0.0
    %57 = vmatpush1.msra.mxu0 0.0
    %58 = vmatprep.subr.mxu0 0.0
    %59 = vmatpush1.msra.mxu0 0.0
    %60 = vmatprep.subr.mxu0 0.0
    %61 = vmatpush1.msra.mxu0 0.0
    %62 = vmatprep.subr.mxu0 0.0
    %63 = vmatpush1.msra.mxu0 0.0
    %64 = vmatprep.subr.mxu0 0.0
    %65 = vmatpush1.msra.mxu0 0.0
    %66 = vmatprep.subr.mxu0 0.0
    %67 = vmatpush1.msra.mxu0 0.0
    %68 = vmatprep.subr.mxu0 0.0
    %69 = vmatpush1.msra.mxu0 0.0
    %70 = vmatprep.subr.mxu0 0.0
    %71 = vmatpush1.msra.mxu0 0.0
    %72 = vmatprep.subr.mxu0 0.0
    %73 = vmatpush1.msra.mxu0 0.0
    %74 = vmatprep.subr.mxu0 0.0
    %75 = vmatpush1.msra.mxu0 0.0
    %76 = vmatprep.subr.mxu0 0.0
    %77 = vmatpush1.msra.mxu0 0.0
    %78 = vmatprep.subr.mxu0 0.0
    %79 = vmatpush1.msra.mxu0 0.0
    %80 = vmatprep.subr.mxu0 0.0
    %81 = vmatpush1.msra.mxu0 0.0
    %82 = vmatprep.subr.mxu0 0.0
    %83 = vmatpush1.msra.mxu0 0.0
    %84 = vmatprep.subr.mxu0 0.0
    %85 = vmatpush1.msra.mxu0 0.0
    %86 = vmatprep.subr.mxu0 0.0
    %87 = vmatpush1.msra.mxu0 0.0
    %88 = vmatprep.subr.mxu0 0.0
    %89 = vmatpush1.msra.mxu0 0.0
    %90 = vmatprep.subr.mxu0 0.0
    %91 = vmatpush1.msra.mxu0 0.0
    %92 = vmatprep.subr.mxu0 0.0
    %93 = vmatpush1.msra.mxu0 0.0
    %94 = vmatprep.subr.mxu0 0.0
    %95 = vmatpush1.msra.mxu0 0.0
    %96 = vmatprep.subr.mxu0 0.0
    %97 = vmatpush1.msra.mxu0 0.0
    %98 = vmatprep.subr.mxu0 0.0
    %99 = vmatpush1.msra.mxu0 0.0
    %100 = vmatprep.subr.mxu0 0.0
    %101 = vmatpush1.msra.mxu0 0.0
    %102 = vmatprep.subr.mxu0 0.0
    %103 = vmatpush1.msra.mxu0 0.0
    %104 = vmatprep.subr.mxu0 0.0
    %105 = vmatpush1.msra.mxu0 0.0
    %106 = vmatprep.subr.mxu0 0.0
    %107 = vmatpush1.msra.mxu0 0.0
    %108 = vmatprep.subr.mxu0 0.0
    %109 = vmatpush1.msra.mxu0 0.0
    %110 = vmatprep.subr.mxu0 0.0
    %111 = vmatpush1.msra.mxu0 0.0
    %112 = vmatprep.mubr.f32.mxu0 0.0
    %113 = vmatmul.mubr.f32.gmra.mrb[0].mxu0 %v43
    %v114 = vpop.f32.mrb[0].mxu0
    %v115 = vadd.f32 %v39, %v114
    %v116 = vpop.f32.mrb[0].mxu0
    %117 = vmatprep.mubr.f32.mxu0 0.0
    %118 = vmatmul.mubr.f32.gmra.mrb[0].mxu0 %v46
    %v119 = vpop.f32.mrb[0].mxu0
    %v120 = vadd.f32 %v39, %v119
    %v121 = vpop.f32.mrb[0].mxu0
    %122 = vdwg.mxu0
    %v123 = vld [vmem:[%s5] sm:$0x1]
    %v125 = vlaneseq
    %v126 = vshrl.u32 %v125, 7
    %v127 = vsub.s32 0, %v126
    %v128 = vrot.slane %v123, %v127
    %v130 = vxor.u32 %v115, 2147483648
    %v131 = vmul.f32 %v130, 1.442695
    %v132 = vpow.pop %v131
    %v133 = vadd.f32 %v132, 1.0
    %v134 = vrcp.pop %v133
    %v135 = vmul.f32 1.0, %v134
    %v136 = vtanh.pop %v115
    %v137 = vmul.f32 %v135, 0.0
    %139 = vrot.lane.b32.xlu0 %v136, 64
    %v140 = vpop.permute.xlu0 %139
    %v142 = vmul.f32 %v135, %v140
    %144 = vrot.lane.b32.xlu0 %v142, 32
    %v145 = vpop.permute.xlu0 %144
    %v147 = vadd.f32 %v137, %v145
    %v148 = vtanh.pop %v147
    %150 = vrot.lane.b32.xlu0 %v148, 64
    %v151 = vpop.permute.xlu0 %150
    %v153 = vmul.f32 %v135, %v151
    %v154 = vld [vmem:[%s3] sm:$0xff]
    %v155 = vld [vmem:[%s3 + $0x8] sm:$0xff]
    %v156 = vld [vmem:[%s3 + $0x10] sm:$0xff]
    %v157 = vld [vmem:[%s3 + $0x18] sm:$0xff]
    %v158 = vld [vmem:[%s3 + $0x20] sm:$0xff]
    %v159 = vld [vmem:[%s3 + $0x28] sm:$0xff]
    %v160 = vld [vmem:[%s3 + $0x30] sm:$0xff]
    %v161 = vld [vmem:[%s3 + $0x38] sm:$0xff]
    %163 = vrot.lane.b32.xlu0 %v153, 32
    %v164 = vpop.permute.xlu0 %163
    %vm165 = vcmask 261120
    %v166 = vsel %vm165, %v164, 0
    %168 = vmatprep.subr.mxu0 %v155
    %169 = vmatpush1.msra.mxu0 %v154
    %170 = vmatprep.subr.mxu0 %v157
    %171 = vmatpush1.msra.mxu0 %v156
    %172 = vmatprep.subr.mxu0 %v159
    %173 = vmatpush1.msra.mxu0 %v158
    %174 = vmatprep.subr.mxu0 %v161
    %175 = vmatpush1.msra.mxu0 %v160
    %176 = vmatprep.subr.mxu0 0.0
    %177 = vmatpush1.msra.mxu0 0.0
    %178 = vmatprep.subr.mxu0 0.0
    %179 = vmatpush1.msra.mxu0 0.0
    %180 = vmatprep.subr.mxu0 0.0
    %181 = vmatpush1.msra.mxu0 0.0
    %182 = vmatprep.subr.mxu0 0.0
    %183 = vmatpush1.msra.mxu0 0.0
    %184 = vmatprep.subr.mxu0 0.0
    %185 = vmatpush1.msra.mxu0 0.0
    %186 = vmatprep.subr.mxu0 0.0
    %187 = vmatpush1.msra.mxu0 0.0
    %188 = vmatprep.subr.mxu0 0.0
    %189 = vmatpush1.msra.mxu0 0.0
    %190 = vmatprep.subr.mxu0 0.0
    %191 = vmatpush1.msra.mxu0 0.0
    %192 = vmatprep.subr.mxu0 0.0
    %193 = vmatpush1.msra.mxu0 0.0
    %194 = vmatprep.subr.mxu0 0.0
    %195 = vmatpush1.msra.mxu0 0.0
    %196 = vmatprep.subr.mxu0 0.0
    %197 = vmatpush1.msra.mxu0 0.0
    %198 = vmatprep.subr.mxu0 0.0
    %199 = vmatpush1.msra.mxu0 0.0
    %200 = vmatprep.subr.mxu0 0.0
    %201 = vmatpush1.msra.mxu0 0.0
    %202 = vmatprep.subr.mxu0 0.0
    %203 = vmatpush1.msra.mxu0 0.0
    %204 = vmatprep.subr.mxu0 0.0
    %205 = vmatpush1.msra.mxu0 0.0
    %206 = vmatprep.subr.mxu0 0.0
    %207 = vmatpush1.msra.mxu0 0.0
    %208 = vmatprep.subr.mxu0 0.0
    %209 = vmatpush1.msra.mxu0 0.0
    %210 = vmatprep.subr.mxu0 0.0
    %211 = vmatpush1.msra.mxu0 0.0
    %212 = vmatprep.subr.mxu0 0.0
    %213 = vmatpush1.msra.mxu0 0.0
    %214 = vmatprep.subr.mxu0 0.0
    %215 = vmatpush1.msra.mxu0 0.0
    %216 = vmatprep.subr.mxu0 0.0
    %217 = vmatpush1.msra.mxu0 0.0
    %218 = vmatprep.subr.mxu0 0.0
    %219 = vmatpush1.msra.mxu0 0.0
    %220 = vmatprep.subr.mxu0 0.0
    %221 = vmatpush1.msra.mxu0 0.0
    %222 = vmatprep.subr.mxu0 0.0
    %223 = vmatpush1.msra.mxu0 0.0
    %224 = vmatprep.subr.mxu0 0.0
    %225 = vmatpush1.msra.mxu0 0.0
    %226 = vmatprep.subr.mxu0 0.0
    %227 = vmatpush1.msra.mxu0 0.0
    %228 = vmatprep.subr.mxu0 0.0
    %229 = vmatpush1.msra.mxu0 0.0
    %230 = vmatprep.subr.mxu0 0.0
    %231 = vmatpush1.msra.mxu0 0.0
    %232 = vmatprep.mubr.f32.mxu0 0.0
    %233 = vmatmul.mubr.f32.gmra.mrb[0].mxu0 %v166
    %v234 = vpop.f32.mrb[0].mxu0
    %v235 = vadd.f32 0.0, %v234
    %v236 = vpop.f32.mrb[0].mxu0
    %v237 = vadd.f32 0.0, %v236
    %238 = vdwg.mxu0
    %v239 = vld [vmem:[%s4] sm:$0xff]
    %v240 = vld [vmem:[%s4 + $0x8] sm:$0xff]
    %v241 = vld [vmem:[%s4 + $0x10] sm:$0xff]
    %v242 = vld [vmem:[%s4 + $0x18] sm:$0xff]
    %v244 = vsel %vm165, 0.0, 0
    %246 = vmatprep.subr.mxu0 0.0
    %247 = vmatpush1.msra.mxu0 %v239
    %248 = vmatprep.subr.mxu0 0.0
    %249 = vmatpush1.msra.mxu0 %v240
    %250 = vmatprep.subr.mxu0 0.0
    %251 = vmatpush1.msra.mxu0 %v241
    %252 = vmatprep.subr.mxu0 0.0
    %253 = vmatpush1.msra.mxu0 %v242
    %254 = vmatprep.subr.mxu0 0.0
    %255 = vmatpush1.msra.mxu0 0.0
    %256 = vmatprep.subr.mxu0 0.0
    %257 = vmatpush1.msra.mxu0 0.0
    %258 = vmatprep.subr.mxu0 0.0
    %259 = vmatpush1.msra.mxu0 0.0
    %260 = vmatprep.subr.mxu0 0.0
    %261 = vmatpush1.msra.mxu0 0.0
    %262 = vmatprep.subr.mxu0 0.0
    %263 = vmatpush1.msra.mxu0 0.0
    %264 = vmatprep.subr.mxu0 0.0
    %265 = vmatpush1.msra.mxu0 0.0
    %266 = vmatprep.subr.mxu0 0.0
    %267 = vmatpush1.msra.mxu0 0.0
    %268 = vmatprep.subr.mxu0 0.0
    %269 = vmatpush1.msra.mxu0 0.0
    %270 = vmatprep.subr.mxu0 0.0
    %271 = vmatpush1.msra.mxu0 0.0
    %272 = vmatprep.subr.mxu0 0.0
    %273 = vmatpush1.msra.mxu0 0.0
    %274 = vmatprep.subr.mxu0 0.0
    %275 = vmatpush1.msra.mxu0 0.0
    %276 = vmatprep.subr.mxu0 0.0
    %277 = vmatpush1.msra.mxu0 0.0
    %278 = vmatprep.subr.mxu0 0.0
    %279 = vmatpush1.msra.mxu0 0.0
    %280 = vmatprep.subr.mxu0 0.0
    %281 = vmatpush1.msra.mxu0 0.0
    %282 = vmatprep.subr.mxu0 0.0
    %283 = vmatpush1.msra.mxu0 0.0
    %284 = vmatprep.subr.mxu0 0.0
    %285 = vmatpush1.msra.mxu0 0.0
    %286 = vmatprep.subr.mxu0 0.0
    %287 = vmatpush1.msra.mxu0 0.0
    %288 = vmatprep.subr.mxu0 0.0
    %289 = vmatpush1.msra.mxu0 0.0
    %290 = vmatprep.subr.mxu0 0.0
    %291 = vmatpush1.msra.mxu0 0.0
    %292 = vmatprep.subr.mxu0 0.0
    %293 = vmatpush1.msra.mxu0 0.0
    %294 = vmatprep.subr.mxu0 0.0
    %295 = vmatpush1.msra.mxu0 0.0
    %296 = vmatprep.subr.mxu0 0.0
    %297 = vmatpush1.msra.mxu0 0.0
    %298 = vmatprep.subr.mxu0 0.0
    %299 = vmatpush1.msra.mxu0 0.0
    %300 = vmatprep.subr.mxu0 0.0
    %301 = vmatpush1.msra.mxu0 0.0
    %302 = vmatprep.subr.mxu0 0.0
    %303 = vmatpush1.msra.mxu0 0.0
    %304 = vmatprep.subr.mxu0 0.0
    %305 = vmatpush1.msra.mxu0 0.0
    %306 = vmatprep.subr.mxu0 0.0
    %307 = vmatpush1.msra.mxu0 0.0
    %308 = vmatprep.subr.mxu0 0.0
    %309 = vmatpush1.msra.mxu0 0.0
    %310 = vmatprep.mubr.f32.mxu0 0.0
    %311 = vmatmul.mubr.f32.gmra.mrb[0].mxu0 %v244
    %v312 = vpop.f32.mrb[0].mxu0
    %v313 = vadd.f32 0.0, %v312
    %v314 = vpop.f32.mrb[0].mxu0
    %315 = vdwg.mxu0
    %v317 = vrot.slane %v235, 6
    %v319 = vadd.f32 %v115, %v317
    %v320 = vadd.f32 %v237, %v313
    %v321 = vadd.f32 %v320, %v128
    %v323 = vrot.slane %v319, 2
    %v326 = vrot.slane %v321, 6
    %vm328 = vcmask 1041408
    %v329 = vsel %vm328, %v323, %v326
    %v330 = vsel %vm328, %v147, 0.0
    %v331 = vxor.u32 %v329, 2147483648
    %v332 = vmul.f32 %v331, 1.442695
    %v333 = vpow.pop %v332
    %v334 = vadd.f32 %v333, 1.0
    %v335 = vrcp.pop %v334
    %v336 = vmul.f32 1.0, %v335
    %v337 = vtanh.pop %v329
    %v338 = vmul.f32 %v336, %v330
    %340 = vrot.lane.b32.xlu0 %v337, 64
    %v341 = vpop.permute.xlu0 %340
    %v343 = vmul.f32 %v336, %v341
    %345 = vrot.lane.b32.xlu0 %v343, 32
    %v346 = vpop.permute.xlu0 %345
    %v348 = vadd.f32 %v338, %v346
    %v349 = vtanh.pop %v348
    %351 = vrot.lane.b32.xlu0 %v349, 64
    %v352 = vpop.permute.xlu0 %351
    %v354 = vmul.f32 %v336, %v352
    %356 = vrot.lane.b32.xlu0 %v354, 32
    %v357 = vpop.permute.xlu0 %356
    %v358 = vsel %vm165, %v357, 0
    %360 = vmatprep.subr.mxu0 %v155
    %361 = vmatpush1.msra.mxu0 %v154
    %362 = vmatprep.subr.mxu0 %v157
    %363 = vmatpush1.msra.mxu0 %v156
    %364 = vmatprep.subr.mxu0 %v159
    %365 = vmatpush1.msra.mxu0 %v158
    %366 = vmatprep.subr.mxu0 %v161
    %367 = vmatpush1.msra.mxu0 %v160
    %368 = vmatprep.subr.mxu0 0.0
    %369 = vmatpush1.msra.mxu0 0.0
    %370 = vmatprep.subr.mxu0 0.0
    %371 = vmatpush1.msra.mxu0 0.0
    %372 = vmatprep.subr.mxu0 0.0
    %373 = vmatpush1.msra.mxu0 0.0
    %374 = vmatprep.subr.mxu0 0.0
    %375 = vmatpush1.msra.mxu0 0.0
    %376 = vmatprep.subr.mxu0 0.0
    %377 = vmatpush1.msra.mxu0 0.0
    %378 = vmatprep.subr.mxu0 0.0
    %379 = vmatpush1.msra.mxu0 0.0
    %380 = vmatprep.subr.mxu0 0.0
    %381 = vmatpush1.msra.mxu0 0.0
    %382 = vmatprep.subr.mxu0 0.0
    %383 = vmatpush1.msra.mxu0 0.0
    %384 = vmatprep.subr.mxu0 0.0
    %385 = vmatpush1.msra.mxu0 0.0
    %386 = vmatprep.subr.mxu0 0.0
    %387 = vmatpush1.msra.mxu0 0.0
    %388 = vmatprep.subr.mxu0 0.0
    %389 = vmatpush1.msra.mxu0 0.0
    %390 = vmatprep.subr.mxu0 0.0
    %391 = vmatpush1.msra.mxu0 0.0
    %392 = vmatprep.subr.mxu0 0.0
    %393 = vmatpush1.msra.mxu0 0.0
    %394 = vmatprep.subr.mxu0 0.0
    %395 = vmatpush1.msra.mxu0 0.0
    %396 = vmatprep.subr.mxu0 0.0
    %397 = vmatpush1.msra.mxu0 0.0
    %398 = vmatprep.subr.mxu0 0.0
    %399 = vmatpush1.msra.mxu0 0.0
    %400 = vmatprep.subr.mxu0 0.0
    %401 = vmatpush1.msra.mxu0 0.0
    %402 = vmatprep.subr.mxu0 0.0
    %403 = vmatpush1.msra.mxu0 0.0
    %404 = vmatprep.subr.mxu0 0.0
    %405 = vmatpush1.msra.mxu0 0.0
    %406 = vmatprep.subr.mxu0 0.0
    %407 = vmatpush1.msra.mxu0 0.0
    %408 = vmatprep.subr.mxu0 0.0
    %409 = vmatpush1.msra.mxu0 0.0
    %410 = vmatprep.subr.mxu0 0.0
    %411 = vmatpush1.msra.mxu0 0.0
    %412 = vmatprep.subr.mxu0 0.0
    %413 = vmatpush1.msra.mxu0 0.0
    %414 = vmatprep.subr.mxu0 0.0
    %415 = vmatpush1.msra.mxu0 0.0
    %416 = vmatprep.subr.mxu0 0.0
    %417 = vmatpush1.msra.mxu0 0.0
    %418 = vmatprep.subr.mxu0 0.0
    %419 = vmatpush1.msra.mxu0 0.0
    %420 = vmatprep.subr.mxu0 0.0
    %421 = vmatpush1.msra.mxu0 0.0
    %422 = vmatprep.subr.mxu0 0.0
    %423 = vmatpush1.msra.mxu0 0.0
    %424 = vmatprep.mubr.f32.mxu0 0.0
    %425 = vmatmul.mubr.f32.gmra.mrb[0].mxu0 %v358
    %v426 = vpop.f32.mrb[0].mxu0
    %v427 = vadd.f32 0.0, %v426
    %v428 = vpop.f32.mrb[0].mxu0
    %v429 = vadd.f32 0.0, %v428
    %430 = vdwg.mxu0
    %v431 = vrot.slane %v354, 2
    %432 = vrot.lane.b32.xlu0 %v431, 32
    %v433 = vpop.permute.xlu0 %432
    %v434 = vsel %vm165, %v433, 0
    %436 = vmatprep.subr.mxu0 0.0
    %437 = vmatpush1.msra.mxu0 %v239
    %438 = vmatprep.subr.mxu0 0.0
    %439 = vmatpush1.msra.mxu0 %v240
    %440 = vmatprep.subr.mxu0 0.0
    %441 = vmatpush1.msra.mxu0 %v241
    %442 = vmatprep.subr.mxu0 0.0
    %443 = vmatpush1.msra.mxu0 %v242
    %444 = vmatprep.subr.mxu0 0.0
    %445 = vmatpush1.msra.mxu0 0.0
    %446 = vmatprep.subr.mxu0 0.0
    %447 = vmatpush1.msra.mxu0 0.0
    %448 = vmatprep.subr.mxu0 0.0
    %449 = vmatpush1.msra.mxu0 0.0
    %450 = vmatprep.subr.mxu0 0.0
    %451 = vmatpush1.msra.mxu0 0.0
    %452 = vmatprep.subr.mxu0 0.0
    %453 = vmatpush1.msra.mxu0 0.0
    %454 = vmatprep.subr.mxu0 0.0
    %455 = vmatpush1.msra.mxu0 0.0
    %456 = vmatprep.subr.mxu0 0.0
    %457 = vmatpush1.msra.mxu0 0.0
    %458 = vmatprep.subr.mxu0 0.0
    %459 = vmatpush1.msra.mxu0 0.0
    %460 = vmatprep.subr.mxu0 0.0
    %461 = vmatpush1.msra.mxu0 0.0
    %462 = vmatprep.subr.mxu0 0.0
    %463 = vmatpush1.msra.mxu0 0.0
    %464 = vmatprep.subr.mxu0 0.0
    %465 = vmatpush1.msra.mxu0 0.0
    %466 = vmatprep.subr.mxu0 0.0
    %467 = vmatpush1.msra.mxu0 0.0
    %468 = vmatprep.subr.mxu0 0.0
    %469 = vmatpush1.msra.mxu0 0.0
    %470 = vmatprep.subr.mxu0 0.0
    %471 = vmatpush1.msra.mxu0 0.0
    %472 = vmatprep.subr.mxu0 0.0
    %473 = vmatpush1.msra.mxu0 0.0
    %474 = vmatprep.subr.mxu0 0.0
    %475 = vmatpush1.msra.mxu0 0.0
    %476 = vmatprep.subr.mxu0 0.0
    %477 = vmatpush1.msra.mxu0 0.0
    %478 = vmatprep.subr.mxu0 0.0
    %479 = vmatpush1.msra.mxu0 0.0
    %480 = vmatprep.subr.mxu0 0.0
    %481 = vmatpush1.msra.mxu0 0.0
    %482 = vmatprep.subr.mxu0 0.0
    %483 = vmatpush1.msra.mxu0 0.0
    %484 = vmatprep.subr.mxu0 0.0
    %485 = vmatpush1.msra.mxu0 0.0
    %486 = vmatprep.subr.mxu0 0.0
    %487 = vmatpush1.msra.mxu0 0.0
    %488 = vmatprep.subr.mxu0 0.0
    %489 = vmatpush1.msra.mxu0 0.0
    %490 = vmatprep.subr.mxu0 0.0
    %491 = vmatpush1.msra.mxu0 0.0
    %492 = vmatprep.subr.mxu0 0.0
    %493 = vmatpush1.msra.mxu0 0.0
    %494 = vmatprep.subr.mxu0 0.0
    %495 = vmatpush1.msra.mxu0 0.0
    %496 = vmatprep.subr.mxu0 0.0
    %497 = vmatpush1.msra.mxu0 0.0
    %498 = vmatprep.subr.mxu0 0.0
    %499 = vmatpush1.msra.mxu0 0.0
    %500 = vmatprep.mubr.f32.mxu0 0.0
    %501 = vmatmul.mubr.f32.gmra.mrb[0].mxu0 %v434
    %v502 = vpop.f32.mrb[0].mxu0
    %v503 = vadd.f32 0.0, %v502
    %v504 = vpop.f32.mrb[0].mxu0
    %505 = vdwg.mxu0
    %v507 = vrot.slane %v427, 4
    %v509 = vadd.f32 %v115, %v507
    %v510 = vadd.f32 %v429, %v503
    %v511 = vadd.f32 %v510, %v128
    %v513 = vrot.slane %v509, 4
    %v516 = vrot.slane %v511, 6
    %v518 = vsel %vm328, %v513, %v516
    %v519 = vxor.u32 %v518, 2147483648
    %v520 = vmul.f32 %v519, 1.442695
    %v521 = vpow.pop %v520
    %v522 = vadd.f32 %v521, 1.0
    %v523 = vrcp.pop %v522
    %v524 = vmul.f32 1.0, %v523
    %v525 = vtanh.pop %v518
    %v526 = vmul.f32 %v524, %v348
    %528 = vrot.lane.b32.xlu0 %v525, 64
    %v529 = vpop.permute.xlu0 %528
    %v531 = vmul.f32 %v524, %v529
    %533 = vrot.lane.b32.xlu0 %v531, 32
    %v534 = vpop.permute.xlu0 %533
    %v536 = vadd.f32 %v526, %v534
    %v537 = vtanh.pop %v536
    %539 = vrot.lane.b32.xlu0 %v537, 64
    %v540 = vpop.permute.xlu0 %539
    %v542 = vmul.f32 %v524, %v540
    %544 = vrot.lane.b32.xlu0 %v542, 32
    %v545 = vpop.permute.xlu0 %544
    %v546 = vsel %vm165, %v545, 0
    %548 = vmatprep.subr.mxu0 %v155
    %549 = vmatpush1.msra.mxu0 %v154
    %550 = vmatprep.subr.mxu0 %v157
    %551 = vmatpush1.msra.mxu0 %v156
    %552 = vmatprep.subr.mxu0 %v159
    %553 = vmatpush1.msra.mxu0 %v158
    %554 = vmatprep.subr.mxu0 %v161
    %555 = vmatpush1.msra.mxu0 %v160
    %556 = vmatprep.subr.mxu0 0.0
    %557 = vmatpush1.msra.mxu0 0.0
    %558 = vmatprep.subr.mxu0 0.0
    %559 = vmatpush1.msra.mxu0 0.0
    %560 = vmatprep.subr.mxu0 0.0
    %561 = vmatpush1.msra.mxu0 0.0
    %562 = vmatprep.subr.mxu0 0.0
    %563 = vmatpush1.msra.mxu0 0.0
    %564 = vmatprep.subr.mxu0 0.0
    %565 = vmatpush1.msra.mxu0 0.0
    %566 = vmatprep.subr.mxu0 0.0
    %567 = vmatpush1.msra.mxu0 0.0
    %568 = vmatprep.subr.mxu0 0.0
    %569 = vmatpush1.msra.mxu0 0.0
    %570 = vmatprep.subr.mxu0 0.0
    %571 = vmatpush1.msra.mxu0 0.0
    %572 = vmatprep.subr.mxu0 0.0
    %573 = vmatpush1.msra.mxu0 0.0
    %574 = vmatprep.subr.mxu0 0.0
    %575 = vmatpush1.msra.mxu0 0.0
    %576 = vmatprep.subr.mxu0 0.0
    %577 = vmatpush1.msra.mxu0 0.0
    %578 = vmatprep.subr.mxu0 0.0
    %579 = vmatpush1.msra.mxu0 0.0
    %580 = vmatprep.subr.mxu0 0.0
    %581 = vmatpush1.msra.mxu0 0.0
    %582 = vmatprep.subr.mxu0 0.0
    %583 = vmatpush1.msra.mxu0 0.0
    %584 = vmatprep.subr.mxu0 0.0
    %585 = vmatpush1.msra.mxu0 0.0
    %586 = vmatprep.subr.mxu0 0.0
    %587 = vmatpush1.msra.mxu0 0.0
    %588 = vmatprep.subr.mxu0 0.0
    %589 = vmatpush1.msra.mxu0 0.0
    %590 = vmatprep.subr.mxu0 0.0
    %591 = vmatpush1.msra.mxu0 0.0
    %592 = vmatprep.subr.mxu0 0.0
    %593 = vmatpush1.msra.mxu0 0.0
    %594 = vmatprep.subr.mxu0 0.0
    %595 = vmatpush1.msra.mxu0 0.0
    %596 = vmatprep.subr.mxu0 0.0
    %597 = vmatpush1.msra.mxu0 0.0
    %598 = vmatprep.subr.mxu0 0.0
    %599 = vmatpush1.msra.mxu0 0.0
    %600 = vmatprep.subr.mxu0 0.0
    %601 = vmatpush1.msra.mxu0 0.0
    %602 = vmatprep.subr.mxu0 0.0
    %603 = vmatpush1.msra.mxu0 0.0
    %604 = vmatprep.subr.mxu0 0.0
    %605 = vmatpush1.msra.mxu0 0.0
    %606 = vmatprep.subr.mxu0 0.0
    %607 = vmatpush1.msra.mxu0 0.0
    %608 = vmatprep.subr.mxu0 0.0
    %609 = vmatpush1.msra.mxu0 0.0
    %610 = vmatprep.subr.mxu0 0.0
    %611 = vmatpush1.msra.mxu0 0.0
    %612 = vmatprep.mubr.f32.mxu0 0.0
    %613 = vmatmul.mubr.f32.gmra.mrb[0].mxu0 %v546
    %v614 = vpop.f32.mrb[0].mxu0
    %v615 = vadd.f32 0.0, %v614
    %v616 = vpop.f32.mrb[0].mxu0
    %v617 = vadd.f32 0.0, %v616
    %618 = vdwg.mxu0
    %v619 = vrot.slane %v542, 2
    %620 = vrot.lane.b32.xlu0 %v619, 32
    %v621 = vpop.permute.xlu0 %620
    %v622 = vsel %vm165, %v621, 0
    %624 = vmatprep.subr.mxu0 0.0
    %625 = vmatpush1.msra.mxu0 %v239
    %626 = vmatprep.subr.mxu0 0.0
    %627 = vmatpush1.msra.mxu0 %v240
    %628 = vmatprep.subr.mxu0 0.0
    %629 = vmatpush1.msra.mxu0 %v241
    %630 = vmatprep.subr.mxu0 0.0
    %631 = vmatpush1.msra.mxu0 %v242
    %632 = vmatprep.subr.mxu0 0.0
    %633 = vmatpush1.msra.mxu0 0.0
    %634 = vmatprep.subr.mxu0 0.0
    %635 = vmatpush1.msra.mxu0 0.0
    %636 = vmatprep.subr.mxu0 0.0
    %637 = vmatpush1.msra.mxu0 0.0
    %638 = vmatprep.subr.mxu0 0.0
    %639 = vmatpush1.msra.mxu0 0.0
    %640 = vmatprep.subr.mxu0 0.0
    %641 = vmatpush1.msra.mxu0 0.0
    %642 = vmatprep.subr.mxu0 0.0
    %643 = vmatpush1.msra.mxu0 0.0
    %644 = vmatprep.subr.mxu0 0.0
    %645 = vmatpush1.msra.mxu0 0.0
    %646 = vmatprep.subr.mxu0 0.0
    %647 = vmatpush1.msra.mxu0 0.0
    %648 = vmatprep.subr.mxu0 0.0
    %649 = vmatpush1.msra.mxu0 0.0
    %650 = vmatprep.subr.mxu0 0.0
    %651 = vmatpush1.msra.mxu0 0.0
    %652 = vmatprep.subr.mxu0 0.0
    %653 = vmatpush1.msra.mxu0 0.0
    %654 = vmatprep.subr.mxu0 0.0
    %655 = vmatpush1.msra.mxu0 0.0
    %656 = vmatprep.subr.mxu0 0.0
    %657 = vmatpush1.msra.mxu0 0.0
    %658 = vmatprep.subr.mxu0 0.0
    %659 = vmatpush1.msra.mxu0 0.0
    %660 = vmatprep.subr.mxu0 0.0
    %661 = vmatpush1.msra.mxu0 0.0
    %662 = vmatprep.subr.mxu0 0.0
    %663 = vmatpush1.msra.mxu0 0.0
    %664 = vmatprep.subr.mxu0 0.0
    %665 = vmatpush1.msra.mxu0 0.0
    %666 = vmatprep.subr.mxu0 0.0
    %667 = vmatpush1.msra.mxu0 0.0
    %668 = vmatprep.subr.mxu0 0.0
    %669 = vmatpush1.msra.mxu0 0.0
    %670 = vmatprep.subr.mxu0 0.0
    %671 = vmatpush1.msra.mxu0 0.0
    %672 = vmatprep.subr.mxu0 0.0
    %673 = vmatpush1.msra.mxu0 0.0
    %674 = vmatprep.subr.mxu0 0.0
    %675 = vmatpush1.msra.mxu0 0.0
    %676 = vmatprep.subr.mxu0 0.0
    %677 = vmatpush1.msra.mxu0 0.0
    %678 = vmatprep.subr.mxu0 0.0
    %679 = vmatpush1.msra.mxu0 0.0
    %680 = vmatprep.subr.mxu0 0.0
    %681 = vmatpush1.msra.mxu0 0.0
    %682 = vmatprep.subr.mxu0 0.0
    %683 = vmatpush1.msra.mxu0 0.0
    %684 = vmatprep.subr.mxu0 0.0
    %685 = vmatpush1.msra.mxu0 0.0
    %686 = vmatprep.subr.mxu0 0.0
    %687 = vmatpush1.msra.mxu0 0.0
    %688 = vmatprep.mubr.f32.mxu0 0.0
    %689 = vmatmul.mubr.f32.gmra.mrb[0].mxu0 %v622
    %v690 = vpop.f32.mrb[0].mxu0
    %v691 = vadd.f32 0.0, %v690
    %v692 = vpop.f32.mrb[0].mxu0
    %693 = vdwg.mxu0
    %v695 = vrot.slane %v615, 2
    %v697 = vadd.f32 %v115, %v695
    %v698 = vadd.f32 %v617, %v691
    %v699 = vadd.f32 %v698, %v128
    %v701 = vrot.slane %v697, 6
    %v704 = vrot.slane %v699, 6
    %v706 = vsel %vm328, %v701, %v704
    %v707 = vxor.u32 %v706, 2147483648
    %v708 = vmul.f32 %v707, 1.442695
    %v709 = vpow.pop %v708
    %v710 = vadd.f32 %v709, 1.0
    %v711 = vrcp.pop %v710
    %v712 = vmul.f32 1.0, %v711
    %v713 = vtanh.pop %v706
    %v714 = vmul.f32 %v712, %v536
    %716 = vrot.lane.b32.xlu0 %v713, 64
    %v717 = vpop.permute.xlu0 %716
    %v719 = vmul.f32 %v712, %v717
    %721 = vrot.lane.b32.xlu0 %v719, 32
    %v722 = vpop.permute.xlu0 %721
    %v724 = vadd.f32 %v714, %v722
    %v725 = vtanh.pop %v724
    %727 = vrot.lane.b32.xlu0 %v725, 64
    %v728 = vpop.permute.xlu0 %727
    %v730 = vmul.f32 %v712, %v728
    %732 = vrot.lane.b32.xlu0 %v730, 32
    %v733 = vpop.permute.xlu0 %732
    %v734 = vsel %vm165, %v733, 0
    %736 = vmatprep.subr.mxu0 %v155
    %737 = vmatpush1.msra.mxu0 %v154
    %738 = vmatprep.subr.mxu0 %v157
    %739 = vmatpush1.msra.mxu0 %v156
    %740 = vmatprep.subr.mxu0 %v159
    %741 = vmatpush1.msra.mxu0 %v158
    %742 = vmatprep.subr.mxu0 %v161
    %743 = vmatpush1.msra.mxu0 %v160
    %744 = vmatprep.subr.mxu0 0.0
    %745 = vmatpush1.msra.mxu0 0.0
    %746 = vmatprep.subr.mxu0 0.0
    %747 = vmatpush1.msra.mxu0 0.0
    %748 = vmatprep.subr.mxu0 0.0
    %749 = vmatpush1.msra.mxu0 0.0
    %750 = vmatprep.subr.mxu0 0.0
    %751 = vmatpush1.msra.mxu0 0.0
    %752 = vmatprep.subr.mxu0 0.0
    %753 = vmatpush1.msra.mxu0 0.0
    %754 = vmatprep.subr.mxu0 0.0
    %755 = vmatpush1.msra.mxu0 0.0
    %756 = vmatprep.subr.mxu0 0.0
    %757 = vmatpush1.msra.mxu0 0.0
    %758 = vmatprep.subr.mxu0 0.0
    %759 = vmatpush1.msra.mxu0 0.0
    %760 = vmatprep.subr.mxu0 0.0
    %761 = vmatpush1.msra.mxu0 0.0
    %762 = vmatprep.subr.mxu0 0.0
    %763 = vmatpush1.msra.mxu0 0.0
    %764 = vmatprep.subr.mxu0 0.0
    %765 = vmatpush1.msra.mxu0 0.0
    %766 = vmatprep.subr.mxu0 0.0
    %767 = vmatpush1.msra.mxu0 0.0
    %768 = vmatprep.subr.mxu0 0.0
    %769 = vmatpush1.msra.mxu0 0.0
    %770 = vmatprep.subr.mxu0 0.0
    %771 = vmatpush1.msra.mxu0 0.0
    %772 = vmatprep.subr.mxu0 0.0
    %773 = vmatpush1.msra.mxu0 0.0
    %774 = vmatprep.subr.mxu0 0.0
    %775 = vmatpush1.msra.mxu0 0.0
    %776 = vmatprep.subr.mxu0 0.0
    %777 = vmatpush1.msra.mxu0 0.0
    %778 = vmatprep.subr.mxu0 0.0
    %779 = vmatpush1.msra.mxu0 0.0
    %780 = vmatprep.subr.mxu0 0.0
    %781 = vmatpush1.msra.mxu0 0.0
    %782 = vmatprep.subr.mxu0 0.0
    %783 = vmatpush1.msra.mxu0 0.0
    %784 = vmatprep.subr.mxu0 0.0
    %785 = vmatpush1.msra.mxu0 0.0
    %786 = vmatprep.subr.mxu0 0.0
    %787 = vmatpush1.msra.mxu0 0.0
    %788 = vmatprep.subr.mxu0 0.0
    %789 = vmatpush1.msra.mxu0 0.0
    %790 = vmatprep.subr.mxu0 0.0
    %791 = vmatpush1.msra.mxu0 0.0
    %792 = vmatprep.subr.mxu0 0.0
    %793 = vmatpush1.msra.mxu0 0.0
    %794 = vmatprep.subr.mxu0 0.0
    %795 = vmatpush1.msra.mxu0 0.0
    %796 = vmatprep.subr.mxu0 0.0
    %797 = vmatpush1.msra.mxu0 0.0
    %798 = vmatprep.subr.mxu0 0.0
    %799 = vmatpush1.msra.mxu0 0.0
    %800 = vmatprep.mubr.f32.mxu0 0.0
    %801 = vmatmul.mubr.f32.gmra.mrb[0].mxu0 %v734
    %v802 = vpop.f32.mrb[0].mxu0
    %v803 = vadd.f32 0.0, %v802
    %v804 = vpop.f32.mrb[0].mxu0
    %v805 = vadd.f32 0.0, %v804
    %806 = vdwg.mxu0
    %v807 = vrot.slane %v730, 2
    %808 = vrot.lane.b32.xlu0 %v807, 32
    %v809 = vpop.permute.xlu0 %808
    %v810 = vsel %vm165, %v809, 0
    %812 = vmatprep.subr.mxu0 0.0
    %813 = vmatpush1.msra.mxu0 %v239
    %814 = vmatprep.subr.mxu0 0.0
    %815 = vmatpush1.msra.mxu0 %v240
    %816 = vmatprep.subr.mxu0 0.0
    %817 = vmatpush1.msra.mxu0 %v241
    %818 = vmatprep.subr.mxu0 0.0
    %819 = vmatpush1.msra.mxu0 %v242
    %820 = vmatprep.subr.mxu0 0.0
    %821 = vmatpush1.msra.mxu0 0.0
    %822 = vmatprep.subr.mxu0 0.0
    %823 = vmatpush1.msra.mxu0 0.0
    %824 = vmatprep.subr.mxu0 0.0
    %825 = vmatpush1.msra.mxu0 0.0
    %826 = vmatprep.subr.mxu0 0.0
    %827 = vmatpush1.msra.mxu0 0.0
    %828 = vmatprep.subr.mxu0 0.0
    %829 = vmatpush1.msra.mxu0 0.0
    %830 = vmatprep.subr.mxu0 0.0
    %831 = vmatpush1.msra.mxu0 0.0
    %832 = vmatprep.subr.mxu0 0.0
    %833 = vmatpush1.msra.mxu0 0.0
    %834 = vmatprep.subr.mxu0 0.0
    %835 = vmatpush1.msra.mxu0 0.0
    %836 = vmatprep.subr.mxu0 0.0
    %837 = vmatpush1.msra.mxu0 0.0
    %838 = vmatprep.subr.mxu0 0.0
    %839 = vmatpush1.msra.mxu0 0.0
    %840 = vmatprep.subr.mxu0 0.0
    %841 = vmatpush1.msra.mxu0 0.0
    %842 = vmatprep.subr.mxu0 0.0
    %843 = vmatpush1.msra.mxu0 0.0
    %844 = vmatprep.subr.mxu0 0.0
    %845 = vmatpush1.msra.mxu0 0.0
    %846 = vmatprep.subr.mxu0 0.0
    %847 = vmatpush1.msra.mxu0 0.0
    %848 = vmatprep.subr.mxu0 0.0
    %849 = vmatpush1.msra.mxu0 0.0
    %850 = vmatprep.subr.mxu0 0.0
    %851 = vmatpush1.msra.mxu0 0.0
    %852 = vmatprep.subr.mxu0 0.0
    %853 = vmatpush1.msra.mxu0 0.0
    %854 = vmatprep.subr.mxu0 0.0
    %855 = vmatpush1.msra.mxu0 0.0
    %856 = vmatprep.subr.mxu0 0.0
    %857 = vmatpush1.msra.mxu0 0.0
    %858 = vmatprep.subr.mxu0 0.0
    %859 = vmatpush1.msra.mxu0 0.0
    %860 = vmatprep.subr.mxu0 0.0
    %861 = vmatpush1.msra.mxu0 0.0
    %862 = vmatprep.subr.mxu0 0.0
    %863 = vmatpush1.msra.mxu0 0.0
    %864 = vmatprep.subr.mxu0 0.0
    %865 = vmatpush1.msra.mxu0 0.0
    %866 = vmatprep.subr.mxu0 0.0
    %867 = vmatpush1.msra.mxu0 0.0
    %868 = vmatprep.subr.mxu0 0.0
    %869 = vmatpush1.msra.mxu0 0.0
    %870 = vmatprep.subr.mxu0 0.0
    %871 = vmatpush1.msra.mxu0 0.0
    %872 = vmatprep.subr.mxu0 0.0
    %873 = vmatpush1.msra.mxu0 0.0
    %874 = vmatprep.subr.mxu0 0.0
    %875 = vmatpush1.msra.mxu0 0.0
    %876 = vmatprep.mubr.f32.mxu0 0.0
    %877 = vmatmul.mubr.f32.gmra.mrb[0].mxu0 %v810
    %v878 = vpop.f32.mrb[0].mxu0
    %v879 = vadd.f32 0.0, %v878
    %v880 = vpop.f32.mrb[0].mxu0
    %881 = vdwg.mxu0
    %v882 = vadd.f32 %v120, %v803
    %v883 = vadd.f32 %v805, %v879
    %v884 = vadd.f32 %v883, %v128
    %v886 = vrot.slane %v884, 6
    %v888 = vsel %vm328, %v882, %v886
    %v889 = vxor.u32 %v888, 2147483648
    %v890 = vmul.f32 %v889, 1.442695
    %v891 = vpow.pop %v890
    %v892 = vadd.f32 %v891, 1.0
    %v893 = vrcp.pop %v892
    %v894 = vmul.f32 1.0, %v893
    %v895 = vtanh.pop %v888
    %v896 = vmul.f32 %v894, %v724
    %898 = vrot.lane.b32.xlu0 %v895, 64
    %v899 = vpop.permute.xlu0 %898
    %v901 = vmul.f32 %v894, %v899
    %903 = vrot.lane.b32.xlu0 %v901, 32
    %v904 = vpop.permute.xlu0 %903
    %v906 = vadd.f32 %v896, %v904
    %v907 = vtanh.pop %v906
    %909 = vrot.lane.b32.xlu0 %v907, 64
    %v910 = vpop.permute.xlu0 %909
    %v912 = vmul.f32 %v894, %v910
    %914 = vrot.lane.b32.xlu0 %v912, 32
    %v915 = vpop.permute.xlu0 %914
    %v916 = vsel %vm165, %v915, 0
    %918 = vmatprep.subr.mxu0 %v155
    %919 = vmatpush1.msra.mxu0 %v154
    %920 = vmatprep.subr.mxu0 %v157
    %921 = vmatpush1.msra.mxu0 %v156
    %922 = vmatprep.subr.mxu0 %v159
    %923 = vmatpush1.msra.mxu0 %v158
    %924 = vmatprep.subr.mxu0 %v161
    %925 = vmatpush1.msra.mxu0 %v160
    %926 = vmatprep.subr.mxu0 0.0
    %927 = vmatpush1.msra.mxu0 0.0
    %928 = vmatprep.subr.mxu0 0.0
    %929 = vmatpush1.msra.mxu0 0.0
    %930 = vmatprep.subr.mxu0 0.0
    %931 = vmatpush1.msra.mxu0 0.0
    %932 = vmatprep.subr.mxu0 0.0
    %933 = vmatpush1.msra.mxu0 0.0
    %934 = vmatprep.subr.mxu0 0.0
    %935 = vmatpush1.msra.mxu0 0.0
    %936 = vmatprep.subr.mxu0 0.0
    %937 = vmatpush1.msra.mxu0 0.0
    %938 = vmatprep.subr.mxu0 0.0
    %939 = vmatpush1.msra.mxu0 0.0
    %940 = vmatprep.subr.mxu0 0.0
    %941 = vmatpush1.msra.mxu0 0.0
    %942 = vmatprep.subr.mxu0 0.0
    %943 = vmatpush1.msra.mxu0 0.0
    %944 = vmatprep.subr.mxu0 0.0
    %945 = vmatpush1.msra.mxu0 0.0
    %946 = vmatprep.subr.mxu0 0.0
    %947 = vmatpush1.msra.mxu0 0.0
    %948 = vmatprep.subr.mxu0 0.0
    %949 = vmatpush1.msra.mxu0 0.0
    %950 = vmatprep.subr.mxu0 0.0
    %951 = vmatpush1.msra.mxu0 0.0
    %952 = vmatprep.subr.mxu0 0.0
    %953 = vmatpush1.msra.mxu0 0.0
    %954 = vmatprep.subr.mxu0 0.0
    %955 = vmatpush1.msra.mxu0 0.0
    %956 = vmatprep.subr.mxu0 0.0
    %957 = vmatpush1.msra.mxu0 0.0
    %958 = vmatprep.subr.mxu0 0.0
    %959 = vmatpush1.msra.mxu0 0.0
    %960 = vmatprep.subr.mxu0 0.0
    %961 = vmatpush1.msra.mxu0 0.0
    %962 = vmatprep.subr.mxu0 0.0
    %963 = vmatpush1.msra.mxu0 0.0
    %964 = vmatprep.subr.mxu0 0.0
    %965 = vmatpush1.msra.mxu0 0.0
    %966 = vmatprep.subr.mxu0 0.0
    %967 = vmatpush1.msra.mxu0 0.0
    %968 = vmatprep.subr.mxu0 0.0
    %969 = vmatpush1.msra.mxu0 0.0
    %970 = vmatprep.subr.mxu0 0.0
    %971 = vmatpush1.msra.mxu0 0.0
    %972 = vmatprep.subr.mxu0 0.0
    %973 = vmatpush1.msra.mxu0 0.0
    %974 = vmatprep.subr.mxu0 0.0
    %975 = vmatpush1.msra.mxu0 0.0
    %976 = vmatprep.subr.mxu0 0.0
    %977 = vmatpush1.msra.mxu0 0.0
    %978 = vmatprep.subr.mxu0 0.0
    %979 = vmatpush1.msra.mxu0 0.0
    %980 = vmatprep.subr.mxu0 0.0
    %981 = vmatpush1.msra.mxu0 0.0
    %982 = vmatprep.mubr.f32.mxu0 0.0
    %983 = vmatmul.mubr.f32.gmra.mrb[0].mxu0 %v916
    %v984 = vpop.f32.mrb[0].mxu0
    %v985 = vadd.f32 0.0, %v984
    %v986 = vpop.f32.mrb[0].mxu0
    %v987 = vadd.f32 0.0, %v986
    %988 = vdwg.mxu0
    %v989 = vrot.slane %v912, 2
    %990 = vrot.lane.b32.xlu0 %v989, 32
    %v991 = vpop.permute.xlu0 %990
    %v992 = vsel %vm165, %v991, 0
    %994 = vmatprep.subr.mxu0 0.0
    %995 = vmatpush1.msra.mxu0 %v239
    %996 = vmatprep.subr.mxu0 0.0
    %997 = vmatpush1.msra.mxu0 %v240
    %998 = vmatprep.subr.mxu0 0.0
    %999 = vmatpush1.msra.mxu0 %v241
    %1000 = vmatprep.subr.mxu0 0.0
    %1001 = vmatpush1.msra.mxu0 %v242
    %1002 = vmatprep.subr.mxu0 0.0
    %1003 = vmatpush1.msra.mxu0 0.0
    %1004 = vmatprep.subr.mxu0 0.0
    %1005 = vmatpush1.msra.mxu0 0.0
    %1006 = vmatprep.subr.mxu0 0.0
    %1007 = vmatpush1.msra.mxu0 0.0
    %1008 = vmatprep.subr.mxu0 0.0
    %1009 = vmatpush1.msra.mxu0 0.0
    %1010 = vmatprep.subr.mxu0 0.0
    %1011 = vmatpush1.msra.mxu0 0.0
    %1012 = vmatprep.subr.mxu0 0.0
    %1013 = vmatpush1.msra.mxu0 0.0
    %1014 = vmatprep.subr.mxu0 0.0
    %1015 = vmatpush1.msra.mxu0 0.0
    %1016 = vmatprep.subr.mxu0 0.0
    %1017 = vmatpush1.msra.mxu0 0.0
    %1018 = vmatprep.subr.mxu0 0.0
    %1019 = vmatpush1.msra.mxu0 0.0
    %1020 = vmatprep.subr.mxu0 0.0
    %1021 = vmatpush1.msra.mxu0 0.0
    %1022 = vmatprep.subr.mxu0 0.0
    %1023 = vmatpush1.msra.mxu0 0.0
    %1024 = vmatprep.subr.mxu0 0.0
    %1025 = vmatpush1.msra.mxu0 0.0
    %1026 = vmatprep.subr.mxu0 0.0
    %1027 = vmatpush1.msra.mxu0 0.0
    %1028 = vmatprep.subr.mxu0 0.0
    %1029 = vmatpush1.msra.mxu0 0.0
    %1030 = vmatprep.subr.mxu0 0.0
    %1031 = vmatpush1.msra.mxu0 0.0
    %1032 = vmatprep.subr.mxu0 0.0
    %1033 = vmatpush1.msra.mxu0 0.0
    %1034 = vmatprep.subr.mxu0 0.0
    %1035 = vmatpush1.msra.mxu0 0.0
    %1036 = vmatprep.subr.mxu0 0.0
    %1037 = vmatpush1.msra.mxu0 0.0
    %1038 = vmatprep.subr.mxu0 0.0
    %1039 = vmatpush1.msra.mxu0 0.0
    %1040 = vmatprep.subr.mxu0 0.0
    %1041 = vmatpush1.msra.mxu0 0.0
    %1042 = vmatprep.subr.mxu0 0.0
    %1043 = vmatpush1.msra.mxu0 0.0
    %1044 = vmatprep.subr.mxu0 0.0
    %1045 = vmatpush1.msra.mxu0 0.0
    %1046 = vmatprep.subr.mxu0 0.0
    %1047 = vmatpush1.msra.mxu0 0.0
    %1048 = vmatprep.subr.mxu0 0.0
    %1049 = vmatpush1.msra.mxu0 0.0
    %1050 = vmatprep.subr.mxu0 0.0
    %1051 = vmatpush1.msra.mxu0 0.0
    %1052 = vmatprep.subr.mxu0 0.0
    %1053 = vmatpush1.msra.mxu0 0.0
    %1054 = vmatprep.subr.mxu0 0.0
    %1055 = vmatpush1.msra.mxu0 0.0
    %1056 = vmatprep.subr.mxu0 0.0
    %1057 = vmatpush1.msra.mxu0 0.0
    %1058 = vmatprep.mubr.f32.mxu0 0.0
    %1059 = vmatmul.mubr.f32.gmra.mrb[0].mxu0 %v992
    %v1060 = vpop.f32.mrb[0].mxu0
    %v1061 = vadd.f32 0.0, %v1060
    %v1062 = vpop.f32.mrb[0].mxu0
    %1063 = vdwg.mxu0
    %v1065 = vrot.slane %v985, 6
    %v1067 = vadd.f32 %v120, %v1065
    %v1068 = vadd.f32 %v987, %v1061
    %v1069 = vadd.f32 %v1068, %v128
    %v1071 = vrot.slane %v1067, 2
    %v1074 = vrot.slane %v1069, 6
    %v1076 = vsel %vm328, %v1071, %v1074
    %v1077 = vxor.u32 %v1076, 2147483648
    %v1078 = vmul.f32 %v1077, 1.442695
    %v1079 = vpow.pop %v1078
    %v1080 = vadd.f32 %v1079, 1.0
    %v1081 = vrcp.pop %v1080
    %v1082 = vmul.f32 1.0, %v1081
    %v1083 = vtanh.pop %v1076
    %v1084 = vmul.f32 %v1082, %v906
    %1086 = vrot.lane.b32.xlu0 %v1083, 64
    %v1087 = vpop.permute.xlu0 %1086
    %v1089 = vmul.f32 %v1082, %v1087
    %1091 = vrot.lane.b32.xlu0 %v1089, 32
    %v1092 = vpop.permute.xlu0 %1091
    %v1094 = vadd.f32 %v1084, %v1092
    %v1095 = vtanh.pop %v1094
    %1097 = vrot.lane.b32.xlu0 %v1095, 64
    %v1098 = vpop.permute.xlu0 %1097
    %v1100 = vmul.f32 %v1082, %v1098
    %1102 = vrot.lane.b32.xlu0 %v1100, 32
    %v1103 = vpop.permute.xlu0 %1102
    %v1104 = vsel %vm165, %v1103, 0
    %1106 = vmatprep.subr.mxu0 %v155
    %1107 = vmatpush1.msra.mxu0 %v154
    %1108 = vmatprep.subr.mxu0 %v157
    %1109 = vmatpush1.msra.mxu0 %v156
    %1110 = vmatprep.subr.mxu0 %v159
    %1111 = vmatpush1.msra.mxu0 %v158
    %1112 = vmatprep.subr.mxu0 %v161
    %1113 = vmatpush1.msra.mxu0 %v160
    %1114 = vmatprep.subr.mxu0 0.0
    %1115 = vmatpush1.msra.mxu0 0.0
    %1116 = vmatprep.subr.mxu0 0.0
    %1117 = vmatpush1.msra.mxu0 0.0
    %1118 = vmatprep.subr.mxu0 0.0
    %1119 = vmatpush1.msra.mxu0 0.0
    %1120 = vmatprep.subr.mxu0 0.0
    %1121 = vmatpush1.msra.mxu0 0.0
    %1122 = vmatprep.subr.mxu0 0.0
    %1123 = vmatpush1.msra.mxu0 0.0
    %1124 = vmatprep.subr.mxu0 0.0
    %1125 = vmatpush1.msra.mxu0 0.0
    %1126 = vmatprep.subr.mxu0 0.0
    %1127 = vmatpush1.msra.mxu0 0.0
    %1128 = vmatprep.subr.mxu0 0.0
    %1129 = vmatpush1.msra.mxu0 0.0
    %1130 = vmatprep.subr.mxu0 0.0
    %1131 = vmatpush1.msra.mxu0 0.0
    %1132 = vmatprep.subr.mxu0 0.0
    %1133 = vmatpush1.msra.mxu0 0.0
    %1134 = vmatprep.subr.mxu0 0.0
    %1135 = vmatpush1.msra.mxu0 0.0
    %1136 = vmatprep.subr.mxu0 0.0
    %1137 = vmatpush1.msra.mxu0 0.0
    %1138 = vmatprep.subr.mxu0 0.0
    %1139 = vmatpush1.msra.mxu0 0.0
    %1140 = vmatprep.subr.mxu0 0.0
    %1141 = vmatpush1.msra.mxu0 0.0
    %1142 = vmatprep.subr.mxu0 0.0
    %1143 = vmatpush1.msra.mxu0 0.0
    %1144 = vmatprep.subr.mxu0 0.0
    %1145 = vmatpush1.msra.mxu0 0.0
    %1146 = vmatprep.subr.mxu0 0.0
    %1147 = vmatpush1.msra.mxu0 0.0
    %1148 = vmatprep.subr.mxu0 0.0
    %1149 = vmatpush1.msra.mxu0 0.0
    %1150 = vmatprep.subr.mxu0 0.0
    %1151 = vmatpush1.msra.mxu0 0.0
    %1152 = vmatprep.subr.mxu0 0.0
    %1153 = vmatpush1.msra.mxu0 0.0
    %1154 = vmatprep.subr.mxu0 0.0
    %1155 = vmatpush1.msra.mxu0 0.0
    %1156 = vmatprep.subr.mxu0 0.0
    %1157 = vmatpush1.msra.mxu0 0.0
    %1158 = vmatprep.subr.mxu0 0.0
    %1159 = vmatpush1.msra.mxu0 0.0
    %1160 = vmatprep.subr.mxu0 0.0
    %1161 = vmatpush1.msra.mxu0 0.0
    %1162 = vmatprep.subr.mxu0 0.0
    %1163 = vmatpush1.msra.mxu0 0.0
    %1164 = vmatprep.subr.mxu0 0.0
    %1165 = vmatpush1.msra.mxu0 0.0
    %1166 = vmatprep.subr.mxu0 0.0
    %1167 = vmatpush1.msra.mxu0 0.0
    %1168 = vmatprep.subr.mxu0 0.0
    %1169 = vmatpush1.msra.mxu0 0.0
    %1170 = vmatprep.mubr.f32.mxu0 0.0
    %1171 = vmatmul.mubr.f32.gmra.mrb[0].mxu0 %v1104
    %v1172 = vpop.f32.mrb[0].mxu0
    %v1173 = vadd.f32 0.0, %v1172
    %v1174 = vpop.f32.mrb[0].mxu0
    %v1175 = vadd.f32 0.0, %v1174
    %1176 = vdwg.mxu0
    %v1177 = vrot.slane %v1100, 2
    %1178 = vrot.lane.b32.xlu0 %v1177, 32
    %v1179 = vpop.permute.xlu0 %1178
    %v1180 = vsel %vm165, %v1179, 0
    %1182 = vmatprep.subr.mxu0 0.0
    %1183 = vmatpush1.msra.mxu0 %v239
    %1184 = vmatprep.subr.mxu0 0.0
    %1185 = vmatpush1.msra.mxu0 %v240
    %1186 = vmatprep.subr.mxu0 0.0
    %1187 = vmatpush1.msra.mxu0 %v241
    %1188 = vmatprep.subr.mxu0 0.0
    %1189 = vmatpush1.msra.mxu0 %v242
    %1190 = vmatprep.subr.mxu0 0.0
    %1191 = vmatpush1.msra.mxu0 0.0
    %1192 = vmatprep.subr.mxu0 0.0
    %1193 = vmatpush1.msra.mxu0 0.0
    %1194 = vmatprep.subr.mxu0 0.0
    %1195 = vmatpush1.msra.mxu0 0.0
    %1196 = vmatprep.subr.mxu0 0.0
    %1197 = vmatpush1.msra.mxu0 0.0
    %1198 = vmatprep.subr.mxu0 0.0
    %1199 = vmatpush1.msra.mxu0 0.0
    %1200 = vmatprep.subr.mxu0 0.0
    %1201 = vmatpush1.msra.mxu0 0.0
    %1202 = vmatprep.subr.mxu0 0.0
    %1203 = vmatpush1.msra.mxu0 0.0
    %1204 = vmatprep.subr.mxu0 0.0
    %1205 = vmatpush1.msra.mxu0 0.0
    %1206 = vmatprep.subr.mxu0 0.0
    %1207 = vmatpush1.msra.mxu0 0.0
    %1208 = vmatprep.subr.mxu0 0.0
    %1209 = vmatpush1.msra.mxu0 0.0
    %1210 = vmatprep.subr.mxu0 0.0
    %1211 = vmatpush1.msra.mxu0 0.0
    %1212 = vmatprep.subr.mxu0 0.0
    %1213 = vmatpush1.msra.mxu0 0.0
    %1214 = vmatprep.subr.mxu0 0.0
    %1215 = vmatpush1.msra.mxu0 0.0
    %1216 = vmatprep.subr.mxu0 0.0
    %1217 = vmatpush1.msra.mxu0 0.0
    %1218 = vmatprep.subr.mxu0 0.0
    %1219 = vmatpush1.msra.mxu0 0.0
    %1220 = vmatprep.subr.mxu0 0.0
    %1221 = vmatpush1.msra.mxu0 0.0
    %1222 = vmatprep.subr.mxu0 0.0
    %1223 = vmatpush1.msra.mxu0 0.0
    %1224 = vmatprep.subr.mxu0 0.0
    %1225 = vmatpush1.msra.mxu0 0.0
    %1226 = vmatprep.subr.mxu0 0.0
    %1227 = vmatpush1.msra.mxu0 0.0
    %1228 = vmatprep.subr.mxu0 0.0
    %1229 = vmatpush1.msra.mxu0 0.0
    %1230 = vmatprep.subr.mxu0 0.0
    %1231 = vmatpush1.msra.mxu0 0.0
    %1232 = vmatprep.subr.mxu0 0.0
    %1233 = vmatpush1.msra.mxu0 0.0
    %1234 = vmatprep.subr.mxu0 0.0
    %1235 = vmatpush1.msra.mxu0 0.0
    %1236 = vmatprep.subr.mxu0 0.0
    %1237 = vmatpush1.msra.mxu0 0.0
    %1238 = vmatprep.subr.mxu0 0.0
    %1239 = vmatpush1.msra.mxu0 0.0
    %1240 = vmatprep.subr.mxu0 0.0
    %1241 = vmatpush1.msra.mxu0 0.0
    %1242 = vmatprep.subr.mxu0 0.0
    %1243 = vmatpush1.msra.mxu0 0.0
    %1244 = vmatprep.subr.mxu0 0.0
    %1245 = vmatpush1.msra.mxu0 0.0
    %1246 = vmatprep.mubr.f32.mxu0 0.0
    %1247 = vmatmul.mubr.f32.gmra.mrb[0].mxu0 %v1180
    %v1248 = vpop.f32.mrb[0].mxu0
    %v1249 = vadd.f32 0.0, %v1248
    %v1250 = vpop.f32.mrb[0].mxu0
    %1251 = vdwg.mxu0
    %v1253 = vrot.slane %v1173, 4
    %v1255 = vadd.f32 %v120, %v1253
    %v1256 = vadd.f32 %v1175, %v1249
    %v1257 = vadd.f32 %v1256, %v128
    %v1259 = vrot.slane %v1255, 4
    %v1262 = vrot.slane %v1257, 6
    %v1264 = vsel %vm328, %v1259, %v1262
    %v1265 = vxor.u32 %v1264, 2147483648
    %v1266 = vmul.f32 %v1265, 1.442695
    %v1267 = vpow.pop %v1266
    %v1268 = vadd.f32 %v1267, 1.0
    %v1269 = vrcp.pop %v1268
    %v1270 = vmul.f32 1.0, %v1269
    %v1271 = vtanh.pop %v1264
    %v1272 = vmul.f32 %v1270, %v1094
    %1274 = vrot.lane.b32.xlu0 %v1271, 64
    %v1275 = vpop.permute.xlu0 %1274
    %v1277 = vmul.f32 %v1270, %v1275
    %1279 = vrot.lane.b32.xlu0 %v1277, 32
    %v1280 = vpop.permute.xlu0 %1279
    %v1282 = vadd.f32 %v1272, %v1280
    %v1283 = vtanh.pop %v1282
    %1285 = vrot.lane.b32.xlu0 %v1283, 64
    %v1286 = vpop.permute.xlu0 %1285
    %v1288 = vmul.f32 %v1270, %v1286
    %1290 = vrot.lane.b32.xlu0 %v1288, 32
    %v1291 = vpop.permute.xlu0 %1290
    %v1292 = vsel %vm165, %v1291, 0
    %1294 = vmatprep.subr.mxu0 %v155
    %1295 = vmatpush1.msra.mxu0 %v154
    %1296 = vmatprep.subr.mxu0 %v157
    %1297 = vmatpush1.msra.mxu0 %v156
    %1298 = vmatprep.subr.mxu0 %v159
    %1299 = vmatpush1.msra.mxu0 %v158
    %1300 = vmatprep.subr.mxu0 %v161
    %1301 = vmatpush1.msra.mxu0 %v160
    %1302 = vmatprep.subr.mxu0 0.0
    %1303 = vmatpush1.msra.mxu0 0.0
    %1304 = vmatprep.subr.mxu0 0.0
    %1305 = vmatpush1.msra.mxu0 0.0
    %1306 = vmatprep.subr.mxu0 0.0
    %1307 = vmatpush1.msra.mxu0 0.0
    %1308 = vmatprep.subr.mxu0 0.0
    %1309 = vmatpush1.msra.mxu0 0.0
    %1310 = vmatprep.subr.mxu0 0.0
    %1311 = vmatpush1.msra.mxu0 0.0
    %1312 = vmatprep.subr.mxu0 0.0
    %1313 = vmatpush1.msra.mxu0 0.0
    %1314 = vmatprep.subr.mxu0 0.0
    %1315 = vmatpush1.msra.mxu0 0.0
    %1316 = vmatprep.subr.mxu0 0.0
    %1317 = vmatpush1.msra.mxu0 0.0
    %1318 = vmatprep.subr.mxu0 0.0
    %1319 = vmatpush1.msra.mxu0 0.0
    %1320 = vmatprep.subr.mxu0 0.0
    %1321 = vmatpush1.msra.mxu0 0.0
    %1322 = vmatprep.subr.mxu0 0.0
    %1323 = vmatpush1.msra.mxu0 0.0
    %1324 = vmatprep.subr.mxu0 0.0
    %1325 = vmatpush1.msra.mxu0 0.0
    %1326 = vmatprep.subr.mxu0 0.0
    %1327 = vmatpush1.msra.mxu0 0.0
    %1328 = vmatprep.subr.mxu0 0.0
    %1329 = vmatpush1.msra.mxu0 0.0
    %1330 = vmatprep.subr.mxu0 0.0
    %1331 = vmatpush1.msra.mxu0 0.0
    %1332 = vmatprep.subr.mxu0 0.0
    %1333 = vmatpush1.msra.mxu0 0.0
    %1334 = vmatprep.subr.mxu0 0.0
    %1335 = vmatpush1.msra.mxu0 0.0
    %1336 = vmatprep.subr.mxu0 0.0
    %1337 = vmatpush1.msra.mxu0 0.0
    %1338 = vmatprep.subr.mxu0 0.0
    %1339 = vmatpush1.msra.mxu0 0.0
    %1340 = vmatprep.subr.mxu0 0.0
    %1341 = vmatpush1.msra.mxu0 0.0
    %1342 = vmatprep.subr.mxu0 0.0
    %1343 = vmatpush1.msra.mxu0 0.0
    %1344 = vmatprep.subr.mxu0 0.0
    %1345 = vmatpush1.msra.mxu0 0.0
    %1346 = vmatprep.subr.mxu0 0.0
    %1347 = vmatpush1.msra.mxu0 0.0
    %1348 = vmatprep.subr.mxu0 0.0
    %1349 = vmatpush1.msra.mxu0 0.0
    %1350 = vmatprep.subr.mxu0 0.0
    %1351 = vmatpush1.msra.mxu0 0.0
    %1352 = vmatprep.subr.mxu0 0.0
    %1353 = vmatpush1.msra.mxu0 0.0
    %1354 = vmatprep.subr.mxu0 0.0
    %1355 = vmatpush1.msra.mxu0 0.0
    %1356 = vmatprep.subr.mxu0 0.0
    %1357 = vmatpush1.msra.mxu0 0.0
    %1358 = vmatprep.mubr.f32.mxu0 0.0
    %1359 = vmatmul.mubr.f32.gmra.mrb[0].mxu0 %v1292
    %v1360 = vpop.f32.mrb[0].mxu0
    %v1361 = vadd.f32 0.0, %v1360
    %v1362 = vpop.f32.mrb[0].mxu0
    %v1363 = vadd.f32 0.0, %v1362
    %1364 = vdwg.mxu0
    %v1365 = vrot.slane %v1288, 2
    %1366 = vrot.lane.b32.xlu0 %v1365, 32
    %v1367 = vpop.permute.xlu0 %1366
    %v1368 = vsel %vm165, %v1367, 0
    %1370 = vmatprep.subr.mxu0 0.0
    %1371 = vmatpush1.msra.mxu0 %v239
    %1372 = vmatprep.subr.mxu0 0.0
    %1373 = vmatpush1.msra.mxu0 %v240
    %1374 = vmatprep.subr.mxu0 0.0
    %1375 = vmatpush1.msra.mxu0 %v241
    %1376 = vmatprep.subr.mxu0 0.0
    %1377 = vmatpush1.msra.mxu0 %v242
    %1378 = vmatprep.subr.mxu0 0.0
    %1379 = vmatpush1.msra.mxu0 0.0
    %1380 = vmatprep.subr.mxu0 0.0
    %1381 = vmatpush1.msra.mxu0 0.0
    %1382 = vmatprep.subr.mxu0 0.0
    %1383 = vmatpush1.msra.mxu0 0.0
    %1384 = vmatprep.subr.mxu0 0.0
    %1385 = vmatpush1.msra.mxu0 0.0
    %1386 = vmatprep.subr.mxu0 0.0
    %1387 = vmatpush1.msra.mxu0 0.0
    %1388 = vmatprep.subr.mxu0 0.0
    %1389 = vmatpush1.msra.mxu0 0.0
    %1390 = vmatprep.subr.mxu0 0.0
    %1391 = vmatpush1.msra.mxu0 0.0
    %1392 = vmatprep.subr.mxu0 0.0
    %1393 = vmatpush1.msra.mxu0 0.0
    %1394 = vmatprep.subr.mxu0 0.0
    %1395 = vmatpush1.msra.mxu0 0.0
    %1396 = vmatprep.subr.mxu0 0.0
    %1397 = vmatpush1.msra.mxu0 0.0
    %1398 = vmatprep.subr.mxu0 0.0
    %1399 = vmatpush1.msra.mxu0 0.0
    %1400 = vmatprep.subr.mxu0 0.0
    %1401 = vmatpush1.msra.mxu0 0.0
    %1402 = vmatprep.subr.mxu0 0.0
    %1403 = vmatpush1.msra.mxu0 0.0
    %1404 = vmatprep.subr.mxu0 0.0
    %1405 = vmatpush1.msra.mxu0 0.0
    %1406 = vmatprep.subr.mxu0 0.0
    %1407 = vmatpush1.msra.mxu0 0.0
    %1408 = vmatprep.subr.mxu0 0.0
    %1409 = vmatpush1.msra.mxu0 0.0
    %1410 = vmatprep.subr.mxu0 0.0
    %1411 = vmatpush1.msra.mxu0 0.0
    %1412 = vmatprep.subr.mxu0 0.0
    %1413 = vmatpush1.msra.mxu0 0.0
    %1414 = vmatprep.subr.mxu0 0.0
    %1415 = vmatpush1.msra.mxu0 0.0
    %1416 = vmatprep.subr.mxu0 0.0
    %1417 = vmatpush1.msra.mxu0 0.0
    %1418 = vmatprep.subr.mxu0 0.0
    %1419 = vmatpush1.msra.mxu0 0.0
    %1420 = vmatprep.subr.mxu0 0.0
    %1421 = vmatpush1.msra.mxu0 0.0
    %1422 = vmatprep.subr.mxu0 0.0
    %1423 = vmatpush1.msra.mxu0 0.0
    %1424 = vmatprep.subr.mxu0 0.0
    %1425 = vmatpush1.msra.mxu0 0.0
    %1426 = vmatprep.subr.mxu0 0.0
    %1427 = vmatpush1.msra.mxu0 0.0
    %1428 = vmatprep.subr.mxu0 0.0
    %1429 = vmatpush1.msra.mxu0 0.0
    %1430 = vmatprep.subr.mxu0 0.0
    %1431 = vmatpush1.msra.mxu0 0.0
    %1432 = vmatprep.subr.mxu0 0.0
    %1433 = vmatpush1.msra.mxu0 0.0
    %1434 = vmatprep.mubr.f32.mxu0 0.0
    %1435 = vmatmul.mubr.f32.gmra.mrb[0].mxu0 %v1368
    %v1436 = vpop.f32.mrb[0].mxu0
    %v1437 = vadd.f32 0.0, %v1436
    %v1438 = vpop.f32.mrb[0].mxu0
    %1439 = vdwg.mxu0
    %v1441 = vrot.slane %v1361, 2
    %v1443 = vadd.f32 %v120, %v1441
    %v1444 = vadd.f32 %v1363, %v1437
    %v1445 = vadd.f32 %v1444, %v128
    %v1447 = vrot.slane %v1443, 6
    %v1450 = vrot.slane %v1445, 6
    %v1452 = vsel %vm328, %v1447, %v1450
    %v1453 = vxor.u32 %v1452, 2147483648
    %v1454 = vmul.f32 %v1453, 1.442695
    %v1455 = vpow.pop %v1454
    %v1456 = vadd.f32 %v1455, 1.0
    %v1457 = vrcp.pop %v1456
    %v1458 = vmul.f32 1.0, %v1457
    %v1459 = vtanh.pop %v1452
    %v1460 = vmul.f32 %v1458, %v1282
    %1462 = vrot.lane.b32.xlu0 %v1459, 64
    %v1463 = vpop.permute.xlu0 %1462
    %v1465 = vmul.f32 %v1458, %v1463
    %1467 = vrot.lane.b32.xlu0 %v1465, 32
    %v1468 = vpop.permute.xlu0 %1467
    %v1470 = vadd.f32 %v1460, %v1468
    %v1471 = vtanh.pop %v1470
    %1473 = vrot.lane.b32.xlu0 %v1471, 64
    %v1474 = vpop.permute.xlu0 %1473
    %v1476 = vmul.f32 %v1458, %v1474
    %v1478 = vrot.slane %v1476, 2
    %1479 = vrot.lane.b32.xlu0 %v1478, 32
    %v1480 = vpop.permute.xlu0 %1479
    %v1481 = vsel %vm165, %v1480, 0
    %1483 = vmatprep.subr.mxu0 0.0
    %1484 = vmatpush1.msra.mxu0 %v239
    %1485 = vmatprep.subr.mxu0 0.0
    %1486 = vmatpush1.msra.mxu0 %v240
    %1487 = vmatprep.subr.mxu0 0.0
    %1488 = vmatpush1.msra.mxu0 %v241
    %1489 = vmatprep.subr.mxu0 0.0
    %1490 = vmatpush1.msra.mxu0 %v242
    %1491 = vmatprep.subr.mxu0 0.0
    %1492 = vmatpush1.msra.mxu0 0.0
    %1493 = vmatprep.subr.mxu0 0.0
    %1494 = vmatpush1.msra.mxu0 0.0
    %1495 = vmatprep.subr.mxu0 0.0
    %1496 = vmatpush1.msra.mxu0 0.0
    %1497 = vmatprep.subr.mxu0 0.0
    %1498 = vmatpush1.msra.mxu0 0.0
    %1499 = vmatprep.subr.mxu0 0.0
    %1500 = vmatpush1.msra.mxu0 0.0
    %1501 = vmatprep.subr.mxu0 0.0
    %1502 = vmatpush1.msra.mxu0 0.0
    %1503 = vmatprep.subr.mxu0 0.0
    %1504 = vmatpush1.msra.mxu0 0.0
    %1505 = vmatprep.subr.mxu0 0.0
    %1506 = vmatpush1.msra.mxu0 0.0
    %1507 = vmatprep.subr.mxu0 0.0
    %1508 = vmatpush1.msra.mxu0 0.0
    %1509 = vmatprep.subr.mxu0 0.0
    %1510 = vmatpush1.msra.mxu0 0.0
    %1511 = vmatprep.subr.mxu0 0.0
    %1512 = vmatpush1.msra.mxu0 0.0
    %1513 = vmatprep.subr.mxu0 0.0
    %1514 = vmatpush1.msra.mxu0 0.0
    %1515 = vmatprep.subr.mxu0 0.0
    %1516 = vmatpush1.msra.mxu0 0.0
    %1517 = vmatprep.subr.mxu0 0.0
    %1518 = vmatpush1.msra.mxu0 0.0
    %1519 = vmatprep.subr.mxu0 0.0
    %1520 = vmatpush1.msra.mxu0 0.0
    %1521 = vmatprep.subr.mxu0 0.0
    %1522 = vmatpush1.msra.mxu0 0.0
    %1523 = vmatprep.subr.mxu0 0.0
    %1524 = vmatpush1.msra.mxu0 0.0
    %1525 = vmatprep.subr.mxu0 0.0
    %1526 = vmatpush1.msra.mxu0 0.0
    %1527 = vmatprep.subr.mxu0 0.0
    %1528 = vmatpush1.msra.mxu0 0.0
    %1529 = vmatprep.subr.mxu0 0.0
    %1530 = vmatpush1.msra.mxu0 0.0
    %1531 = vmatprep.subr.mxu0 0.0
    %1532 = vmatpush1.msra.mxu0 0.0
    %1533 = vmatprep.subr.mxu0 0.0
    %1534 = vmatpush1.msra.mxu0 0.0
    %1535 = vmatprep.subr.mxu0 0.0
    %1536 = vmatpush1.msra.mxu0 0.0
    %1537 = vmatprep.subr.mxu0 0.0
    %1538 = vmatpush1.msra.mxu0 0.0
    %1539 = vmatprep.subr.mxu0 0.0
    %1540 = vmatpush1.msra.mxu0 0.0
    %1541 = vmatprep.subr.mxu0 0.0
    %1542 = vmatpush1.msra.mxu0 0.0
    %1543 = vmatprep.subr.mxu0 0.0
    %1544 = vmatpush1.msra.mxu0 0.0
    %1545 = vmatprep.subr.mxu0 0.0
    %1546 = vmatpush1.msra.mxu0 0.0
    %1547 = vmatprep.mubr.f32.mxu0 0.0
    %1548 = vmatmul.mubr.f32.gmra.mrb[0].mxu0 %v1481
    %v1549 = vpop.f32.mrb[0].mxu0
    %v1550 = vadd.f32 0.0, %v1549
    %v1551 = vpop.f32.mrb[0].mxu0
    %1552 = vdwg.mxu0
    %1553 = vrot.lane.b32.xlu0 %v1476, 32
    %v1554 = vpop.permute.xlu0 %1553
    %v1555 = vsel %vm165, %v1554, 0
    %1557 = vmatprep.subr.mxu0 0.0
    %1558 = vmatpush1.msra.mxu0 %v155
    %1559 = vmatprep.subr.mxu0 0.0
    %1560 = vmatpush1.msra.mxu0 %v157
    %1561 = vmatprep.subr.mxu0 0.0
    %1562 = vmatpush1.msra.mxu0 %v159
    %1563 = vmatprep.subr.mxu0 0.0
    %1564 = vmatpush1.msra.mxu0 %v161
    %1565 = vmatprep.subr.mxu0 0.0
    %1566 = vmatpush1.msra.mxu0 0.0
    %1567 = vmatprep.subr.mxu0 0.0
    %1568 = vmatpush1.msra.mxu0 0.0
    %1569 = vmatprep.subr.mxu0 0.0
    %1570 = vmatpush1.msra.mxu0 0.0
    %1571 = vmatprep.subr.mxu0 0.0
    %1572 = vmatpush1.msra.mxu0 0.0
    %1573 = vmatprep.subr.mxu0 0.0
    %1574 = vmatpush1.msra.mxu0 0.0
    %1575 = vmatprep.subr.mxu0 0.0
    %1576 = vmatpush1.msra.mxu0 0.0
    %1577 = vmatprep.subr.mxu0 0.0
    %1578 = vmatpush1.msra.mxu0 0.0
    %1579 = vmatprep.subr.mxu0 0.0
    %1580 = vmatpush1.msra.mxu0 0.0
    %1581 = vmatprep.subr.mxu0 0.0
    %1582 = vmatpush1.msra.mxu0 0.0
    %1583 = vmatprep.subr.mxu0 0.0
    %1584 = vmatpush1.msra.mxu0 0.0
    %1585 = vmatprep.subr.mxu0 0.0
    %1586 = vmatpush1.msra.mxu0 0.0
    %1587 = vmatprep.subr.mxu0 0.0
    %1588 = vmatpush1.msra.mxu0 0.0
    %1589 = vmatprep.subr.mxu0 0.0
    %1590 = vmatpush1.msra.mxu0 0.0
    %1591 = vmatprep.subr.mxu0 0.0
    %1592 = vmatpush1.msra.mxu0 0.0
    %1593 = vmatprep.subr.mxu0 0.0
    %1594 = vmatpush1.msra.mxu0 0.0
    %1595 = vmatprep.subr.mxu0 0.0
    %1596 = vmatpush1.msra.mxu0 0.0
    %1597 = vmatprep.subr.mxu0 0.0
    %1598 = vmatpush1.msra.mxu0 0.0
    %1599 = vmatprep.subr.mxu0 0.0
    %1600 = vmatpush1.msra.mxu0 0.0
    %1601 = vmatprep.subr.mxu0 0.0
    %1602 = vmatpush1.msra.mxu0 0.0
    %1603 = vmatprep.subr.mxu0 0.0
    %1604 = vmatpush1.msra.mxu0 0.0
    %1605 = vmatprep.subr.mxu0 0.0
    %1606 = vmatpush1.msra.mxu0 0.0
    %1607 = vmatprep.subr.mxu0 0.0
    %1608 = vmatpush1.msra.mxu0 0.0
    %1609 = vmatprep.subr.mxu0 0.0
    %1610 = vmatpush1.msra.mxu0 0.0
    %1611 = vmatprep.subr.mxu0 0.0
    %1612 = vmatpush1.msra.mxu0 0.0
    %1613 = vmatprep.subr.mxu0 0.0
    %1614 = vmatpush1.msra.mxu0 0.0
    %1615 = vmatprep.subr.mxu0 0.0
    %1616 = vmatpush1.msra.mxu0 0.0
    %1617 = vmatprep.subr.mxu0 0.0
    %1618 = vmatpush1.msra.mxu0 0.0
    %1619 = vmatprep.subr.mxu0 0.0
    %1620 = vmatpush1.msra.mxu0 0.0
    %1621 = vmatprep.mubr.f32.mxu0 0.0
    %1622 = vmatmul.mubr.f32.gmra.mrb[0].mxu0 %v1555
    %v1623 = vpop.f32.mrb[0].mxu0
    %v1624 = vadd.f32 %v1550, %v1623
    %v1625 = vpop.f32.mrb[0].mxu0
    %1626 = vdwg.mxu0
    %v1627 = vadd.f32 %v1624, %v128
    %v1628 = vxor.u32 %v1627, 2147483648
    %v1629 = vmul.f32 %v1628, 1.442695
    %v1630 = vpow.pop %v1629
    %v1631 = vadd.f32 %v1630, 1.0
    %v1632 = vrcp.pop %v1631
    %v1633 = vmul.f32 1.0, %v1632
    %v1634 = vtanh.pop %v1627
    %v1636 = vrot.slane %v1470, 2
    %v1638 = vmul.f32 %v1633, %v1636
    %1640 = vrot.lane.b32.xlu0 %v1634, 64
    %v1641 = vpop.permute.xlu0 %1640
    %v1643 = vmul.f32 %v1633, %v1641
    %1645 = vrot.lane.b32.xlu0 %v1643, 32
    %v1646 = vpop.permute.xlu0 %1645
    %v1648 = vadd.f32 %v1638, %v1646
    %v1649 = vtanh.pop %v1648
    %1651 = vrot.lane.b32.xlu0 %v1649, 64
    %v1652 = vpop.permute.xlu0 %1651
    %v1654 = vmul.f32 %v1633, %v1652
    %v1655 = vld [vmem:[%s6] sm:$0xff]
    %v1656 = vld [vmem:[%s6 + $0x8] sm:$0xff]
    %v1657 = vld [vmem:[%s6 + $0x10] sm:$0xff]
    %v1658 = vld [vmem:[%s6 + $0x18] sm:$0xff]
    %v1659 = vld [vmem:[%s7] sm:$0x1]
    %v1661 = vlaneseq
    %v1662 = vshrl.u32 %v1661, 7
    %v1663 = vsub.s32 0, %v1662
    %v1664 = vrot.slane %v1659, %v1663
    %1667 = vrot.lane.b32.xlu0 %v1654, 32
    %v1668 = vpop.permute.xlu0 %1667
    %v1669 = vsel %vm165, %v1668, 0
    %1671 = vmatprep.subr.mxu0 0.0
    %1672 = vmatpush1.msra.mxu0 %v1655
    %1673 = vmatprep.subr.mxu0 0.0
    %1674 = vmatpush1.msra.mxu0 %v1656
    %1675 = vmatprep.subr.mxu0 0.0
    %1676 = vmatpush1.msra.mxu0 %v1657
    %1677 = vmatprep.subr.mxu0 0.0
    %1678 = vmatpush1.msra.mxu0 %v1658
    %1679 = vmatprep.subr.mxu0 0.0
    %1680 = vmatpush1.msra.mxu0 0.0
    %1681 = vmatprep.subr.mxu0 0.0
    %1682 = vmatpush1.msra.mxu0 0.0
    %1683 = vmatprep.subr.mxu0 0.0
    %1684 = vmatpush1.msra.mxu0 0.0
    %1685 = vmatprep.subr.mxu0 0.0
    %1686 = vmatpush1.msra.mxu0 0.0
    %1687 = vmatprep.subr.mxu0 0.0
    %1688 = vmatpush1.msra.mxu0 0.0
    %1689 = vmatprep.subr.mxu0 0.0
    %1690 = vmatpush1.msra.mxu0 0.0
    %1691 = vmatprep.subr.mxu0 0.0
    %1692 = vmatpush1.msra.mxu0 0.0
    %1693 = vmatprep.subr.mxu0 0.0
    %1694 = vmatpush1.msra.mxu0 0.0
    %1695 = vmatprep.subr.mxu0 0.0
    %1696 = vmatpush1.msra.mxu0 0.0
    %1697 = vmatprep.subr.mxu0 0.0
    %1698 = vmatpush1.msra.mxu0 0.0
    %1699 = vmatprep.subr.mxu0 0.0
    %1700 = vmatpush1.msra.mxu0 0.0
    %1701 = vmatprep.subr.mxu0 0.0
    %1702 = vmatpush1.msra.mxu0 0.0
    %1703 = vmatprep.subr.mxu0 0.0
    %1704 = vmatpush1.msra.mxu0 0.0
    %1705 = vmatprep.subr.mxu0 0.0
    %1706 = vmatpush1.msra.mxu0 0.0
    %1707 = vmatprep.subr.mxu0 0.0
    %1708 = vmatpush1.msra.mxu0 0.0
    %1709 = vmatprep.subr.mxu0 0.0
    %1710 = vmatpush1.msra.mxu0 0.0
    %1711 = vmatprep.subr.mxu0 0.0
    %1712 = vmatpush1.msra.mxu0 0.0
    %1713 = vmatprep.subr.mxu0 0.0
    %1714 = vmatpush1.msra.mxu0 0.0
    %1715 = vmatprep.subr.mxu0 0.0
    %1716 = vmatpush1.msra.mxu0 0.0
    %1717 = vmatprep.subr.mxu0 0.0
    %1718 = vmatpush1.msra.mxu0 0.0
    %1719 = vmatprep.subr.mxu0 0.0
    %1720 = vmatpush1.msra.mxu0 0.0
    %1721 = vmatprep.subr.mxu0 0.0
    %1722 = vmatpush1.msra.mxu0 0.0
    %1723 = vmatprep.subr.mxu0 0.0
    %1724 = vmatpush1.msra.mxu0 0.0
    %1725 = vmatprep.subr.mxu0 0.0
    %1726 = vmatpush1.msra.mxu0 0.0
    %1727 = vmatprep.subr.mxu0 0.0
    %1728 = vmatpush1.msra.mxu0 0.0
    %1729 = vmatprep.subr.mxu0 0.0
    %1730 = vmatpush1.msra.mxu0 0.0
    %1731 = vmatprep.subr.mxu0 0.0
    %1732 = vmatpush1.msra.mxu0 0.0
    %1733 = vmatprep.subr.mxu0 0.0
    %1734 = vmatpush1.msra.mxu0 0.0
    %1735 = vmatprep.mubr.f32.mxu0 0.0
    %1736 = vmatmul.mubr.f32.gmra.mrb[0].mxu0 %v1669
    %v1737 = vpop.f32.mrb[0].mxu0
    %v1738 = vadd.f32 %v1664, %v1737
    %v1739 = vpop.f32.mrb[0].mxu0
    %1740 = vdwg.mxu0
    %vm1741 = vcmask 123904
    %1742 = vst.msk [vmem:[#allocation2] sm:$0x3] %vm1741, %v1738
    // Predicated region
    $region34: #{lstm_model_forward.1} parent=1 // pred_check
      _
    $region35: #{lstm_model_forward.1} parent=1 // pred_check_branch
      %1744 = sbr.rel (0) target = $region37
    $region36: #{lstm_model_forward.1} parent=1 // pred_region
      %s1746 = ssub.s32 32, 32
      %1747 = vsyncadd [#allocation3], %s1746
      %s1749 = sshll.u32 [#allocation2], 4
      %s1750 = int_to_ptr.vmem [resolvable:$true] %s1749
      %1752 = dma.vmem_to_hbm [thread:$0]  %s1750, 32, %s8, [#allocation3]
    $region37: #{lstm_model_forward.1} parent=1 // pred_fallthru
      _
    // Predicated region
    $region38: #{lstm_model_forward.1} parent=1 // pred_check
      _
    $region39: #{lstm_model_forward.1} parent=1 // pred_check_branch
      %1754 = sbr.rel (0) target = $region41
    $region40: #{lstm_model_forward.1} parent=1 // pred_region
      %1755 = dma.done [#allocation3], 32
    $region41: #{lstm_model_forward.1} parent=1 // pred_fallthru
      _
    %1756 = vsyncpa [#allocation3], 1

</llo_original>
